<compile_context>
chip_gen: v7x
topology: tpu7x:2x2x1
jax: 0.10.0
libtpu: 0.0.40
codegen_flags: <defaults>
</compile_context>

<pallas_src>
import functools

import jax
import jax.numpy as jnp
from jax.experimental import pallas as pl
from jax.experimental.pallas import tpu as pltpu

N_HEADS = 4    # qt / qs / qft / qfs
PAD = 128      # lane-dense width of the positive-logit output block

# Whole-array, VMEM-resident operands (no grid, no tiling needed at these sizes).
_VMEM = pl.BlockSpec(memory_space=pltpu.MemorySpace.VMEM)


# ----------------------------- Pallas kernels ------------------------------

def _encoder_kernel(x_ref, w_ref, o_ref, *, dim, n_heads):
    """Both encoders (e=0 query, e=1 key) in one step.

    (N, F) bf16 @ (F, n_heads*dim) bf16 on the MXU with f32 accumulation; the
    per-head L2-normalize epilogue stays f32 (v5e VPU/EUP have no bf16).  Each
    head slice is 128 lanes wide -> unmasked lane-aligned stores.
    """
    for e in range(2):
        y = jnp.dot(x_ref[e], w_ref[e], preferred_element_type=jnp.float32)
        for h in range(n_heads):
            seg = y[:, h * dim:(h + 1) * dim]
            # x / max(||x||, 1e-12)  (torch F.normalize eps), via EUP rsqrt
            inv = jax.lax.rsqrt(jnp.maximum(
                jnp.sum(seg * seg, axis=1, keepdims=True), 1e-24))
            o_ref[e, :, h * dim:(h + 1) * dim] = seg * inv


def fused_encoder(x_stacked, w_stacked, *, dim, n_heads=N_HEADS):
    """x_stacked (2,N,F) bf16, w_stacked (2,F,n_heads*dim) bf16 -> (2,N,n_heads*dim) f32."""
    _, n, _ = x_stacked.shape
    out_c = n_heads * dim
    # TODO(synk): once the real PretrainingEncoder replaces this synthetic
    # linear projection, tile its contraction axis with a grid + f32 VMEM
    # accumulator (pl.when init/finalize) and budget tiles against v5e's
    # 16 MiB default scoped VMEM / v7x's 64 MiB physical VMEM; at larger N the
    # 2-encoder axis can become a CORE_PARALLEL grid axis on v7x.
    return pl.pallas_call(
        functools.partial(_encoder_kernel, dim=dim, n_heads=n_heads),
        out_shape=jax.ShapeDtypeStruct((2, n, out_c), jnp.float32),
        in_specs=[_VMEM, _VMEM],
        out_specs=_VMEM,
    )(x_stacked, w_stacked)


def _moco_logits_kernel(feats_ref, queues_ref, pos_ref, neg_ref, *, dim, inv_t):
    """All six MoCo contrastive pairs in one step.

    feats_ref:  (2, N, 4*dim) f32 normalized features (0 = query enc, 1 = key).
    queues_ref: (4, dim, K)   bf16 negative queues [t, s, ft, fs], VMEM-resident.
    pos_ref:    (6, N, PAD)   f32 positive logit broadcast over a 128-lane block.
    neg_ref:    (6, N, K)     f32 negative logits.
    Pair order: [t, s, f1, f2, i1, i2].
    """
    n = feats_ref.shape[1]
    q = feats_ref[0]
    k = feats_ref[1]
    qt, qs, qft, qfs = (q[:, h * dim:(h + 1) * dim] for h in range(4))
    kt, ks, kft, kfs = (k[:, h * dim:(h + 1) * dim] for h in range(4))

    # Positive logits: VPU mul + lane reduce, stored as lane-dense 128-wide rows.
    pos_pairs = ((qt, kft), (qs, kfs), (qft, kt), (qfs, ks), (qt, ks), (qs, kt))
    for p, (a, b) in enumerate(pos_pairs):
        pos = jnp.sum(a * b, axis=1, keepdims=True) * inv_t            # (N, 1)
        pos_ref[p] = jnp.broadcast_to(pos, (n, PAD))

    # Negative logits: bf16 MXU matmuls with f32 accumulation, merged by queue.
    qt_b = qt.astype(jnp.bfloat16)
    qs_b = qs.astype(jnp.bfloat16)
    qft_b = qft.astype(jnp.bfloat16)
    qfs_b = qfs.astype(jnp.bfloat16)
    # t_queue (idx 0) serves pairs f1 (qft) and i2 (qs): one (2N,C)@(C,K) dot.
    neg_t = jnp.dot(jnp.concatenate([qft_b, qs_b], axis=0), queues_ref[0],
                    preferred_element_type=jnp.float32) * inv_t        # (2N, K)
    neg_ref[2] = neg_t[:n]
    neg_ref[5] = neg_t[n:]
    # s_queue (idx 1) serves pairs f2 (qfs) and i1 (qt).
    neg_s = jnp.dot(jnp.concatenate([qfs_b, qt_b], axis=0), queues_ref[1],
                    preferred_element_type=jnp.float32) * inv_t
    neg_ref[3] = neg_s[:n]
    neg_ref[4] = neg_s[n:]
    # ft_queue (idx 2) -> pair t (qt);  fs_queue (idx 3) -> pair s (qs).
    neg_ref[0] = jnp.dot(qt_b, queues_ref[2],
                         preferred_element_type=jnp.float32) * inv_t
    neg_ref[1] = jnp.dot(qs_b, queues_ref[3],
                         preferred_element_type=jnp.float32) * inv_t


def fused_moco_logits(feats, queues_bf16, *, temperature, dim):
    """feats (2,N,4*dim) f32 + queues (4,dim,K) bf16 -> (pos (6,N,PAD), neg (6,N,K))."""
    _, n, _ = feats.shape
    _, _, kq = queues_bf16.shape
    return pl.pallas_call(
        functools.partial(_moco_logits_kernel, dim=dim, inv_t=1.0 / temperature),
        out_shape=(jax.ShapeDtypeStruct((6, n, PAD), jnp.float32),
                   jax.ShapeDtypeStruct((6, n, kq), jnp.float32)),
        in_specs=[_VMEM, _VMEM],
        out_specs=(_VMEM, _VMEM),
    )(feats, queues_bf16)


# -------------------------- STDA_Net (functional) ---------------------------

def xavier_uniform(key, shape):
    fan_in, fan_out = shape
    a = jnp.sqrt(6.0 / (fan_in + fan_out))
    return jax.random.uniform(key, shape, jnp.float32, -a, a)


def init_stda_net(key, in_features, dim=128, K=512):
    kq, kqueue = jax.random.split(key)
    # Synthetic PretrainingEncoder: single (F, 4*dim) xavier projection.
    w_q = xavier_uniform(kq, (in_features, N_HEADS * dim))
    w_k = w_q                                      # param_k.data.copy_(param_q)
    # Stacked queues [t, s, ft, fs]; each column L2-normalized (dim=0), stored
    # bf16 (negatives are bf16 MXU operands anyway; halves queue HBM traffic).
    queues = jax.random.normal(kqueue, (4, dim, K), jnp.float32)
    queues = queues / jnp.maximum(
        jnp.linalg.norm(queues, axis=1, keepdims=True), 1e-12)
    queues = queues.astype(jnp.bfloat16)
    ptrs = jnp.zeros((4,), jnp.int32)
    return w_q, w_k, queues, ptrs


@functools.partial(jax.jit,
                   static_argnames=("dim", "K", "m", "T"),
                   donate_argnames=("queues",))
def stda_forward(w_q, w_k, queues, ptrs, xq, xk, *, dim, K, m, T):
    n = xq.shape[0]

    # Momentum update of the key encoder (no-grad in the reference).
    w_k_new = jax.lax.stop_gradient(w_k * m + w_q * (1.0 - m))

    # Fused query+key encoder: one pallas_call, bf16 MXU operands.
    # TODO(synk): allow_input_fusion on the weight operand could fold the
    # momentum mix + stack + bf16 cast into the kernel's input DMA.
    x_stacked = jnp.stack([xq.reshape(n, -1), xk.reshape(n, -1)]
                          ).astype(jnp.bfloat16)                 # (2, N, F)
    w_stacked = jnp.stack([w_q, w_k_new]).astype(jnp.bfloat16)   # (2, F, 4*dim)
    feats = fused_encoder(x_stacked, w_stacked, dim=dim)         # (2, N, 4*dim) f32
    # Key-path features already carry no gradient (w_k_new is stop_gradient'd,
    # xk is an input), mirroring the reference @torch.no_grad() key branch.

    # All six contrastive pairs in one kernel call (pair order t,s,f1,f2,i1,i2).
    pos, neg = fused_moco_logits(feats, queues, temperature=T, dim=dim)
    # [pos | neg] assembly matches the reference torch.cat (tiny XLA glue).
    logits = tuple(jnp.concatenate([pos[p, :, :1], neg[p]], axis=1)
                   for p in range(6))
    labels = jnp.zeros((n,), dtype=jnp.int32)

    # Dequeue & enqueue (key head h -> queue h, bf16 state).  The reference
    # asserts K % N == 0, so ptr+N never wraps and dynamic_update_slice
    # (which clamps) is exact here.
    k_feats = feats[1].astype(jnp.bfloat16)                      # (N, 4*dim)
    new_queues = queues
    for h in range(4):
        keys_h = k_feats[:, h * dim:(h + 1) * dim]               # (N, dim)
        new_queues = jax.lax.dynamic_update_slice(
            new_queues, keys_h.T[None, :, :], (h, 0, ptrs[h]))
    new_ptrs = (ptrs + n) % K

    outputs = logits + (labels,) * 6
    return outputs, (w_k_new, new_queues, new_ptrs)


# ---------------------------------- main ------------------------------------

if __name__ == "__main__":
    key = jax.random.PRNGKey(0)
    k_init, k_xq, k_xk = jax.random.split(key, 3)

    # Small synthetic shapes: batch=8, channels=3, frames=16, joints=8.
    N, C_in, T_len, V = 8, 3, 16, 8
    dim, K_queue, m, T = 128, 512, 0.999, 0.07
    in_features = C_in * T_len * V
    assert K_queue % N == 0   # mirrors the reference _dequeue_and_enqueue assert

    w_q, w_k, queues, ptrs = init_stda_net(k_init, in_features,
                                           dim=dim, K=K_queue)

    xq = jax.random.normal(k_xq, (N, C_in, T_len, V), jnp.float32)
    xk = jax.random.normal(k_xk, (N, C_in, T_len, V), jnp.float32)

    outputs, (w_k_new, new_queues, new_ptrs) = stda_forward(
        w_q, w_k, queues, ptrs, xq, xk, dim=dim, K=K_queue, m=m, T=T)

    outputs = jax.block_until_ready(outputs)
    jax.block_until_ready(new_queues)
    jax.block_until_ready(new_ptrs)

    # sanity: six logits of shape (N, 1+K), six labels of shape (N,)
    assert outputs[0].shape == (N, 1 + K_queue)
    assert outputs[5].shape == (N, 1 + K_queue)
    assert outputs[6].shape == (N,)
    print("KERNEL_OK")
</pallas_src>

<mosaic_0001>
module attributes {stable_mosaic.version = 11 : i64} {
  func.func @_encoder_kernel(%arg0: memref<2x8x384xbf16, #tpu.memory_space<vmem>>, %arg1: memref<2x384x512xbf16, #tpu.memory_space<vmem>>, %arg2: memref<2x8x512xf32, #tpu.memory_space<vmem>>) attributes {dimension_semantics = [], scalar_prefetch = 0 : i64, scratch_operands = 0 : i64, tpu.core_type = #tpu.core_type<tc>} {
    %c0 = arith.constant 0 : index
    %c0_0 = arith.constant 0 : index
    %c0_1 = arith.constant 0 : index
    %0 = vector.load %arg0[%c0, %c0_0, %c0_1] : memref<2x8x384xbf16, #tpu.memory_space<vmem>>, vector<1x8x384xbf16>
    %1 = vector.shape_cast %0 : vector<1x8x384xbf16> to vector<8x384xbf16>
    %c0_2 = arith.constant 0 : index
    %c0_3 = arith.constant 0 : index
    %c0_4 = arith.constant 0 : index
    %2 = vector.load %arg1[%c0_2, %c0_3, %c0_4] : memref<2x384x512xbf16, #tpu.memory_space<vmem>>, vector<1x384x512xbf16>
    %3 = vector.shape_cast %2 : vector<1x384x512xbf16> to vector<384x512xbf16>
    %cst = arith.constant dense<0.000000e+00> : vector<8x512xf32>
    %4 = tpu.matmul %1, %3, %cst {dimension_numbers = #tpu.dot_dimension_numbers<[1], [0], [0], [1], [0, 0, 1, 1], [], []>} : vector<8x384xbf16>, vector<384x512xbf16>, vector<8x512xf32> -> vector<8x512xf32>
    %5 = vector.extract_strided_slice %4 {offsets = [0, 0], sizes = [8, 128], strides = [1, 1]} : vector<8x512xf32> to vector<8x128xf32>
    %6 = arith.mulf %5, %5 : vector<8x128xf32>
    %cst_5 = arith.constant dense<0.000000e+00> : vector<8xf32>
    %7 = vector.multi_reduction <add>, %6, %cst_5 [1] : vector<8x128xf32> to vector<8xf32>
    %8 = vector.shape_cast %7 : vector<8xf32> to vector<8x1xf32>
    %cst_6 = arith.constant 1.000000e-24 : f32
    %9 = vector.broadcast %cst_6 : f32 to vector<8x1xf32>
    %10 = arith.maximumf %8, %9 : vector<8x1xf32>
    %11 = math.rsqrt %10 : vector<8x1xf32>
    %12 = vector.broadcast %11 : vector<8x1xf32> to vector<8x128xf32>
    %13 = arith.mulf %5, %12 : vector<8x128xf32>
    %c0_7 = arith.constant 0 : index
    %c0_8 = arith.constant 0 : index
    %c0_9 = arith.constant 0 : index
    %14 = vector.load %arg2[%c0_7, %c0_8, %c0_9] : memref<2x8x512xf32, #tpu.memory_space<vmem>>, vector<1x8x128xf32>
    %15 = vector.shape_cast %14 : vector<1x8x128xf32> to vector<8x128xf32>
    %16 = vector.shape_cast %13 : vector<8x128xf32> to vector<1x8x128xf32>
    tpu.vector_store %arg2[%c0_7, %c0_8, %c0_9], %16 {strides = array<i32>} : memref<2x8x512xf32, #tpu.memory_space<vmem>>, vector<1x8x128xf32>,
    %17 = vector.extract_strided_slice %4 {offsets = [0, 128], sizes = [8, 128], strides = [1, 1]} : vector<8x512xf32> to vector<8x128xf32>
    %18 = arith.mulf %17, %17 : vector<8x128xf32>
    %cst_10 = arith.constant dense<0.000000e+00> : vector<8xf32>
    %19 = vector.multi_reduction <add>, %18, %cst_10 [1] : vector<8x128xf32> to vector<8xf32>
    %20 = vector.shape_cast %19 : vector<8xf32> to vector<8x1xf32>
    %cst_11 = arith.constant 1.000000e-24 : f32
    %21 = vector.broadcast %cst_11 : f32 to vector<8x1xf32>
    %22 = arith.maximumf %20, %21 : vector<8x1xf32>
    %23 = math.rsqrt %22 : vector<8x1xf32>
    %24 = vector.broadcast %23 : vector<8x1xf32> to vector<8x128xf32>
    %25 = arith.mulf %17, %24 : vector<8x128xf32>
    %c0_12 = arith.constant 0 : index
    %c0_13 = arith.constant 0 : index
    %c128 = arith.constant 128 : index
    %26 = vector.load %arg2[%c0_12, %c0_13, %c128] : memref<2x8x512xf32, #tpu.memory_space<vmem>>, vector<1x8x128xf32>
    %27 = vector.shape_cast %26 : vector<1x8x128xf32> to vector<8x128xf32>
    %28 = vector.shape_cast %25 : vector<8x128xf32> to vector<1x8x128xf32>
    tpu.vector_store %arg2[%c0_12, %c0_13, %c128], %28 {strides = array<i32>} : memref<2x8x512xf32, #tpu.memory_space<vmem>>, vector<1x8x128xf32>,
    %29 = vector.extract_strided_slice %4 {offsets = [0, 256], sizes = [8, 128], strides = [1, 1]} : vector<8x512xf32> to vector<8x128xf32>
    %30 = arith.mulf %29, %29 : vector<8x128xf32>
    %cst_14 = arith.constant dense<0.000000e+00> : vector<8xf32>
    %31 = vector.multi_reduction <add>, %30, %cst_14 [1] : vector<8x128xf32> to vector<8xf32>
    %32 = vector.shape_cast %31 : vector<8xf32> to vector<8x1xf32>
    %cst_15 = arith.constant 1.000000e-24 : f32
    %33 = vector.broadcast %cst_15 : f32 to vector<8x1xf32>
    %34 = arith.maximumf %32, %33 : vector<8x1xf32>
    %35 = math.rsqrt %34 : vector<8x1xf32>
    %36 = vector.broadcast %35 : vector<8x1xf32> to vector<8x128xf32>
    %37 = arith.mulf %29, %36 : vector<8x128xf32>
    %c0_16 = arith.constant 0 : index
    %c0_17 = arith.constant 0 : index
    %c256 = arith.constant 256 : index
    %38 = vector.load %arg2[%c0_16, %c0_17, %c256] : memref<2x8x512xf32, #tpu.memory_space<vmem>>, vector<1x8x128xf32>
    %39 = vector.shape_cast %38 : vector<1x8x128xf32> to vector<8x128xf32>
    %40 = vector.shape_cast %37 : vector<8x128xf32> to vector<1x8x128xf32>
    tpu.vector_store %arg2[%c0_16, %c0_17, %c256], %40 {strides = array<i32>} : memref<2x8x512xf32, #tpu.memory_space<vmem>>, vector<1x8x128xf32>,
    %41 = vector.extract_strided_slice %4 {offsets = [0, 384], sizes = [8, 128], strides = [1, 1]} : vector<8x512xf32> to vector<8x128xf32>
    %42 = arith.mulf %41, %41 : vector<8x128xf32>
    %cst_18 = arith.constant dense<0.000000e+00> : vector<8xf32>
    %43 = vector.multi_reduction <add>, %42, %cst_18 [1] : vector<8x128xf32> to vector<8xf32>
    %44 = vector.shape_cast %43 : vector<8xf32> to vector<8x1xf32>
    %cst_19 = arith.constant 1.000000e-24 : f32
    %45 = vector.broadcast %cst_19 : f32 to vector<8x1xf32>
    %46 = arith.maximumf %44, %45 : vector<8x1xf32>
    %47 = math.rsqrt %46 : vector<8x1xf32>
    %48 = vector.broadcast %47 : vector<8x1xf32> to vector<8x128xf32>
    %49 = arith.mulf %41, %48 : vector<8x128xf32>
    %c0_20 = arith.constant 0 : index
    %c0_21 = arith.constant 0 : index
    %c384 = arith.constant 384 : index
    %50 = vector.load %arg2[%c0_20, %c0_21, %c384] : memref<2x8x512xf32, #tpu.memory_space<vmem>>, vector<1x8x128xf32>
    %51 = vector.shape_cast %50 : vector<1x8x128xf32> to vector<8x128xf32>
    %52 = vector.shape_cast %49 : vector<8x128xf32> to vector<1x8x128xf32>
    tpu.vector_store %arg2[%c0_20, %c0_21, %c384], %52 {strides = array<i32>} : memref<2x8x512xf32, #tpu.memory_space<vmem>>, vector<1x8x128xf32>,
    %c1 = arith.constant 1 : index
    %c0_22 = arith.constant 0 : index
    %c0_23 = arith.constant 0 : index
    %53 = vector.load %arg0[%c1, %c0_22, %c0_23] : memref<2x8x384xbf16, #tpu.memory_space<vmem>>, vector<1x8x384xbf16>
    %54 = vector.shape_cast %53 : vector<1x8x384xbf16> to vector<8x384xbf16>
    %c1_24 = arith.constant 1 : index
    %c0_25 = arith.constant 0 : index
    %c0_26 = arith.constant 0 : index
    %55 = vector.load %arg1[%c1_24, %c0_25, %c0_26] : memref<2x384x512xbf16, #tpu.memory_space<vmem>>, vector<1x384x512xbf16>
    %56 = vector.shape_cast %55 : vector<1x384x512xbf16> to vector<384x512xbf16>
    %cst_27 = arith.constant dense<0.000000e+00> : vector<8x512xf32>
    %57 = tpu.matmul %54, %56, %cst_27 {dimension_numbers = #tpu.dot_dimension_numbers<[1], [0], [0], [1], [0, 0, 1, 1], [], []>} : vector<8x384xbf16>, vector<384x512xbf16>, vector<8x512xf32> -> vector<8x512xf32>
    %58 = vector.extract_strided_slice %57 {offsets = [0, 0], sizes = [8, 128], strides = [1, 1]} : vector<8x512xf32> to vector<8x128xf32>
    %59 = arith.mulf %58, %58 : vector<8x128xf32>
    %cst_28 = arith.constant dense<0.000000e+00> : vector<8xf32>
    %60 = vector.multi_reduction <add>, %59, %cst_28 [1] : vector<8x128xf32> to vector<8xf32>
    %61 = vector.shape_cast %60 : vector<8xf32> to vector<8x1xf32>
    %cst_29 = arith.constant 1.000000e-24 : f32
    %62 = vector.broadcast %cst_29 : f32 to vector<8x1xf32>
    %63 = arith.maximumf %61, %62 : vector<8x1xf32>
    %64 = math.rsqrt %63 : vector<8x1xf32>
    %65 = vector.broadcast %64 : vector<8x1xf32> to vector<8x128xf32>
    %66 = arith.mulf %58, %65 : vector<8x128xf32>
    %c1_30 = arith.constant 1 : index
    %c0_31 = arith.constant 0 : index
    %c0_32 = arith.constant 0 : index
    %67 = vector.load %arg2[%c1_30, %c0_31, %c0_32] : memref<2x8x512xf32, #tpu.memory_space<vmem>>, vector<1x8x128xf32>
    %68 = vector.shape_cast %67 : vector<1x8x128xf32> to vector<8x128xf32>
    %69 = vector.shape_cast %66 : vector<8x128xf32> to vector<1x8x128xf32>
    tpu.vector_store %arg2[%c1_30, %c0_31, %c0_32], %69 {strides = array<i32>} : memref<2x8x512xf32, #tpu.memory_space<vmem>>, vector<1x8x128xf32>,
    %70 = vector.extract_strided_slice %57 {offsets = [0, 128], sizes = [8, 128], strides = [1, 1]} : vector<8x512xf32> to vector<8x128xf32>
    %71 = arith.mulf %70, %70 : vector<8x128xf32>
    %cst_33 = arith.constant dense<0.000000e+00> : vector<8xf32>
    %72 = vector.multi_reduction <add>, %71, %cst_33 [1] : vector<8x128xf32> to vector<8xf32>
    %73 = vector.shape_cast %72 : vector<8xf32> to vector<8x1xf32>
    %cst_34 = arith.constant 1.000000e-24 : f32
    %74 = vector.broadcast %cst_34 : f32 to vector<8x1xf32>
    %75 = arith.maximumf %73, %74 : vector<8x1xf32>
    %76 = math.rsqrt %75 : vector<8x1xf32>
    %77 = vector.broadcast %76 : vector<8x1xf32> to vector<8x128xf32>
    %78 = arith.mulf %70, %77 : vector<8x128xf32>
    %c1_35 = arith.constant 1 : index
    %c0_36 = arith.constant 0 : index
    %c128_37 = arith.constant 128 : index
    %79 = vector.load %arg2[%c1_35, %c0_36, %c128_37] : memref<2x8x512xf32, #tpu.memory_space<vmem>>, vector<1x8x128xf32>
    %80 = vector.shape_cast %79 : vector<1x8x128xf32> to vector<8x128xf32>
    %81 = vector.shape_cast %78 : vector<8x128xf32> to vector<1x8x128xf32>
    tpu.vector_store %arg2[%c1_35, %c0_36, %c128_37], %81 {strides = array<i32>} : memref<2x8x512xf32, #tpu.memory_space<vmem>>, vector<1x8x128xf32>,
    %82 = vector.extract_strided_slice %57 {offsets = [0, 256], sizes = [8, 128], strides = [1, 1]} : vector<8x512xf32> to vector<8x128xf32>
    %83 = arith.mulf %82, %82 : vector<8x128xf32>
    %cst_38 = arith.constant dense<0.000000e+00> : vector<8xf32>
    %84 = vector.multi_reduction <add>, %83, %cst_38 [1] : vector<8x128xf32> to vector<8xf32>
    %85 = vector.shape_cast %84 : vector<8xf32> to vector<8x1xf32>
    %cst_39 = arith.constant 1.000000e-24 : f32
    %86 = vector.broadcast %cst_39 : f32 to vector<8x1xf32>
    %87 = arith.maximumf %85, %86 : vector<8x1xf32>
    %88 = math.rsqrt %87 : vector<8x1xf32>
    %89 = vector.broadcast %88 : vector<8x1xf32> to vector<8x128xf32>
    %90 = arith.mulf %82, %89 : vector<8x128xf32>
    %c1_40 = arith.constant 1 : index
    %c0_41 = arith.constant 0 : index
    %c256_42 = arith.constant 256 : index
    %91 = vector.load %arg2[%c1_40, %c0_41, %c256_42] : memref<2x8x512xf32, #tpu.memory_space<vmem>>, vector<1x8x128xf32>
    %92 = vector.shape_cast %91 : vector<1x8x128xf32> to vector<8x128xf32>
    %93 = vector.shape_cast %90 : vector<8x128xf32> to vector<1x8x128xf32>
    tpu.vector_store %arg2[%c1_40, %c0_41, %c256_42], %93 {strides = array<i32>} : memref<2x8x512xf32, #tpu.memory_space<vmem>>, vector<1x8x128xf32>,
    %94 = vector.extract_strided_slice %57 {offsets = [0, 384], sizes = [8, 128], strides = [1, 1]} : vector<8x512xf32> to vector<8x128xf32>
    %95 = arith.mulf %94, %94 : vector<8x128xf32>
    %cst_43 = arith.constant dense<0.000000e+00> : vector<8xf32>
    %96 = vector.multi_reduction <add>, %95, %cst_43 [1] : vector<8x128xf32> to vector<8xf32>
    %97 = vector.shape_cast %96 : vector<8xf32> to vector<8x1xf32>
    %cst_44 = arith.constant 1.000000e-24 : f32
    %98 = vector.broadcast %cst_44 : f32 to vector<8x1xf32>
    %99 = arith.maximumf %97, %98 : vector<8x1xf32>
    %100 = math.rsqrt %99 : vector<8x1xf32>
    %101 = vector.broadcast %100 : vector<8x1xf32> to vector<8x128xf32>
    %102 = arith.mulf %94, %101 : vector<8x128xf32>
    %c1_45 = arith.constant 1 : index
    %c0_46 = arith.constant 0 : index
    %c384_47 = arith.constant 384 : index
    %103 = vector.load %arg2[%c1_45, %c0_46, %c384_47] : memref<2x8x512xf32, #tpu.memory_space<vmem>>, vector<1x8x128xf32>
    %104 = vector.shape_cast %103 : vector<1x8x128xf32> to vector<8x128xf32>
    %105 = vector.shape_cast %102 : vector<8x128xf32> to vector<1x8x128xf32>
    tpu.vector_store %arg2[%c1_45, %c0_46, %c384_47], %105 {strides = array<i32>} : memref<2x8x512xf32, #tpu.memory_space<vmem>>, vector<1x8x128xf32>,
    return
  }
}

module attributes {stable_mosaic.version = 11 : i64} {
  func.func @_moco_logits_kernel(%arg0: memref<2x8x512xf32, #tpu.memory_space<vmem>>, %arg1: memref<4x128x512xbf16, #tpu.memory_space<vmem>>, %arg2: memref<6x8x128xf32, #tpu.memory_space<vmem>>, %arg3: memref<6x8x512xf32, #tpu.memory_space<vmem>>) attributes {dimension_semantics = [], scalar_prefetch = 0 : i64, scratch_operands = 0 : i64, tpu.core_type = #tpu.core_type<tc>} {
    %c0 = arith.constant 0 : index
    %c0_0 = arith.constant 0 : index
    %c0_1 = arith.constant 0 : index
    %0 = vector.load %arg0[%c0, %c0_0, %c0_1] : memref<2x8x512xf32, #tpu.memory_space<vmem>>, vector<1x8x512xf32>
    %1 = vector.shape_cast %0 : vector<1x8x512xf32> to vector<8x512xf32>
    %c1 = arith.constant 1 : index
    %c0_2 = arith.constant 0 : index
    %c0_3 = arith.constant 0 : index
    %2 = vector.load %arg0[%c1, %c0_2, %c0_3] : memref<2x8x512xf32, #tpu.memory_space<vmem>>, vector<1x8x512xf32>
    %3 = vector.shape_cast %2 : vector<1x8x512xf32> to vector<8x512xf32>
    %4 = vector.extract_strided_slice %1 {offsets = [0, 0], sizes = [8, 128], strides = [1, 1]} : vector<8x512xf32> to vector<8x128xf32>
    %5 = vector.extract_strided_slice %1 {offsets = [0, 128], sizes = [8, 128], strides = [1, 1]} : vector<8x512xf32> to vector<8x128xf32>
    %6 = vector.extract_strided_slice %1 {offsets = [0, 256], sizes = [8, 128], strides = [1, 1]} : vector<8x512xf32> to vector<8x128xf32>
    %7 = vector.extract_strided_slice %1 {offsets = [0, 384], sizes = [8, 128], strides = [1, 1]} : vector<8x512xf32> to vector<8x128xf32>
    %8 = vector.extract_strided_slice %3 {offsets = [0, 0], sizes = [8, 128], strides = [1, 1]} : vector<8x512xf32> to vector<8x128xf32>
    %9 = vector.extract_strided_slice %3 {offsets = [0, 128], sizes = [8, 128], strides = [1, 1]} : vector<8x512xf32> to vector<8x128xf32>
    %10 = vector.extract_strided_slice %3 {offsets = [0, 256], sizes = [8, 128], strides = [1, 1]} : vector<8x512xf32> to vector<8x128xf32>
    %11 = vector.extract_strided_slice %3 {offsets = [0, 384], sizes = [8, 128], strides = [1, 1]} : vector<8x512xf32> to vector<8x128xf32>
    %12 = arith.mulf %4, %10 : vector<8x128xf32>
    %cst = arith.constant dense<0.000000e+00> : vector<8xf32>
    %13 = vector.multi_reduction <add>, %12, %cst [1] : vector<8x128xf32> to vector<8xf32>
    %14 = vector.shape_cast %13 : vector<8xf32> to vector<8x1xf32>
    %cst_4 = arith.constant 14.2857141 : f32
    %15 = vector.broadcast %cst_4 : f32 to vector<8x1xf32>
    %16 = arith.mulf %14, %15 : vector<8x1xf32>
    %17 = vector.shape_cast %16 : vector<8x1xf32> to vector<8x1xf32>
    %18 = vector.broadcast %17 : vector<8x1xf32> to vector<8x128xf32>
    %c0_5 = arith.constant 0 : index
    %c0_6 = arith.constant 0 : index
    %c0_7 = arith.constant 0 : index
    %19 = vector.load %arg2[%c0_5, %c0_6, %c0_7] : memref<6x8x128xf32, #tpu.memory_space<vmem>>, vector<1x8x128xf32>
    %20 = vector.shape_cast %19 : vector<1x8x128xf32> to vector<8x128xf32>
    %21 = vector.shape_cast %18 : vector<8x128xf32> to vector<1x8x128xf32>
    tpu.vector_store %arg2[%c0_5, %c0_6, %c0_7], %21 {strides = array<i32>} : memref<6x8x128xf32, #tpu.memory_space<vmem>>, vector<1x8x128xf32>,
    %22 = arith.mulf %5, %11 : vector<8x128xf32>
    %cst_8 = arith.constant dense<0.000000e+00> : vector<8xf32>
    %23 = vector.multi_reduction <add>, %22, %cst_8 [1] : vector<8x128xf32> to vector<8xf32>
    %24 = vector.shape_cast %23 : vector<8xf32> to vector<8x1xf32>
    %cst_9 = arith.constant 14.2857141 : f32
    %25 = vector.broadcast %cst_9 : f32 to vector<8x1xf32>
    %26 = arith.mulf %24, %25 : vector<8x1xf32>
    %27 = vector.shape_cast %26 : vector<8x1xf32> to vector<8x1xf32>
    %28 = vector.broadcast %27 : vector<8x1xf32> to vector<8x128xf32>
    %c1_10 = arith.constant 1 : index
    %c0_11 = arith.constant 0 : index
    %c0_12 = arith.constant 0 : index
    %29 = vector.load %arg2[%c1_10, %c0_11, %c0_12] : memref<6x8x128xf32, #tpu.memory_space<vmem>>, vector<1x8x128xf32>
    %30 = vector.shape_cast %29 : vector<1x8x128xf32> to vector<8x128xf32>
    %31 = vector.shape_cast %28 : vector<8x128xf32> to vector<1x8x128xf32>
    tpu.vector_store %arg2[%c1_10, %c0_11, %c0_12], %31 {strides = array<i32>} : memref<6x8x128xf32, #tpu.memory_space<vmem>>, vector<1x8x128xf32>,
    %32 = arith.mulf %6, %8 : vector<8x128xf32>
    %cst_13 = arith.constant dense<0.000000e+00> : vector<8xf32>
    %33 = vector.multi_reduction <add>, %32, %cst_13 [1] : vector<8x128xf32> to vector<8xf32>
    %34 = vector.shape_cast %33 : vector<8xf32> to vector<8x1xf32>
    %cst_14 = arith.constant 14.2857141 : f32
    %35 = vector.broadcast %cst_14 : f32 to vector<8x1xf32>
    %36 = arith.mulf %34, %35 : vector<8x1xf32>
    %37 = vector.shape_cast %36 : vector<8x1xf32> to vector<8x1xf32>
    %38 = vector.broadcast %37 : vector<8x1xf32> to vector<8x128xf32>
    %c2 = arith.constant 2 : index
    %c0_15 = arith.constant 0 : index
    %c0_16 = arith.constant 0 : index
    %39 = vector.load %arg2[%c2, %c0_15, %c0_16] : memref<6x8x128xf32, #tpu.memory_space<vmem>>, vector<1x8x128xf32>
    %40 = vector.shape_cast %39 : vector<1x8x128xf32> to vector<8x128xf32>
    %41 = vector.shape_cast %38 : vector<8x128xf32> to vector<1x8x128xf32>
    tpu.vector_store %arg2[%c2, %c0_15, %c0_16], %41 {strides = array<i32>} : memref<6x8x128xf32, #tpu.memory_space<vmem>>, vector<1x8x128xf32>,
    %42 = arith.mulf %7, %9 : vector<8x128xf32>
    %cst_17 = arith.constant dense<0.000000e+00> : vector<8xf32>
    %43 = vector.multi_reduction <add>, %42, %cst_17 [1] : vector<8x128xf32> to vector<8xf32>
    %44 = vector.shape_cast %43 : vector<8xf32> to vector<8x1xf32>
    %cst_18 = arith.constant 14.2857141 : f32
    %45 = vector.broadcast %cst_18 : f32 to vector<8x1xf32>
    %46 = arith.mulf %44, %45 : vector<8x1xf32>
    %47 = vector.shape_cast %46 : vector<8x1xf32> to vector<8x1xf32>
    %48 = vector.broadcast %47 : vector<8x1xf32> to vector<8x128xf32>
    %c3 = arith.constant 3 : index
    %c0_19 = arith.constant 0 : index
    %c0_20 = arith.constant 0 : index
    %49 = vector.load %arg2[%c3, %c0_19, %c0_20] : memref<6x8x128xf32, #tpu.memory_space<vmem>>, vector<1x8x128xf32>
    %50 = vector.shape_cast %49 : vector<1x8x128xf32> to vector<8x128xf32>
    %51 = vector.shape_cast %48 : vector<8x128xf32> to vector<1x8x128xf32>
    tpu.vector_store %arg2[%c3, %c0_19, %c0_20], %51 {strides = array<i32>} : memref<6x8x128xf32, #tpu.memory_space<vmem>>, vector<1x8x128xf32>,
    %52 = arith.mulf %4, %9 : vector<8x128xf32>
    %cst_21 = arith.constant dense<0.000000e+00> : vector<8xf32>
    %53 = vector.multi_reduction <add>, %52, %cst_21 [1] : vector<8x128xf32> to vector<8xf32>
    %54 = vector.shape_cast %53 : vector<8xf32> to vector<8x1xf32>
    %cst_22 = arith.constant 14.2857141 : f32
    %55 = vector.broadcast %cst_22 : f32 to vector<8x1xf32>
    %56 = arith.mulf %54, %55 : vector<8x1xf32>
    %57 = vector.shape_cast %56 : vector<8x1xf32> to vector<8x1xf32>
    %58 = vector.broadcast %57 : vector<8x1xf32> to vector<8x128xf32>
    %c4 = arith.constant 4 : index
    %c0_23 = arith.constant 0 : index
    %c0_24 = arith.constant 0 : index
    %59 = vector.load %arg2[%c4, %c0_23, %c0_24] : memref<6x8x128xf32, #tpu.memory_space<vmem>>, vector<1x8x128xf32>
    %60 = vector.shape_cast %59 : vector<1x8x128xf32> to vector<8x128xf32>
    %61 = vector.shape_cast %58 : vector<8x128xf32> to vector<1x8x128xf32>
    tpu.vector_store %arg2[%c4, %c0_23, %c0_24], %61 {strides = array<i32>} : memref<6x8x128xf32, #tpu.memory_space<vmem>>, vector<1x8x128xf32>,
    %62 = arith.mulf %5, %8 : vector<8x128xf32>
    %cst_25 = arith.constant dense<0.000000e+00> : vector<8xf32>
    %63 = vector.multi_reduction <add>, %62, %cst_25 [1] : vector<8x128xf32> to vector<8xf32>
    %64 = vector.shape_cast %63 : vector<8xf32> to vector<8x1xf32>
    %cst_26 = arith.constant 14.2857141 : f32
    %65 = vector.broadcast %cst_26 : f32 to vector<8x1xf32>
    %66 = arith.mulf %64, %65 : vector<8x1xf32>
    %67 = vector.shape_cast %66 : vector<8x1xf32> to vector<8x1xf32>
    %68 = vector.broadcast %67 : vector<8x1xf32> to vector<8x128xf32>
    %c5 = arith.constant 5 : index
    %c0_27 = arith.constant 0 : index
    %c0_28 = arith.constant 0 : index
    %69 = vector.load %arg2[%c5, %c0_27, %c0_28] : memref<6x8x128xf32, #tpu.memory_space<vmem>>, vector<1x8x128xf32>
    %70 = vector.shape_cast %69 : vector<1x8x128xf32> to vector<8x128xf32>
    %71 = vector.shape_cast %68 : vector<8x128xf32> to vector<1x8x128xf32>
    tpu.vector_store %arg2[%c5, %c0_27, %c0_28], %71 {strides = array<i32>} : memref<6x8x128xf32, #tpu.memory_space<vmem>>, vector<1x8x128xf32>,
    %72 = arith.truncf %4 : vector<8x128xf32> to vector<8x128xbf16>
    %73 = arith.truncf %5 : vector<8x128xf32> to vector<8x128xbf16>
    %74 = arith.truncf %6 : vector<8x128xf32> to vector<8x128xbf16>
    %75 = arith.truncf %7 : vector<8x128xf32> to vector<8x128xbf16>
    %76 = tpu.concatenate %74, %73 in 0 : vector<8x128xbf16>, vector<8x128xbf16> -> vector<16x128xbf16>
    %c0_29 = arith.constant 0 : index
    %c0_30 = arith.constant 0 : index
    %c0_31 = arith.constant 0 : index
    %77 = vector.load %arg1[%c0_29, %c0_30, %c0_31] : memref<4x128x512xbf16, #tpu.memory_space<vmem>>, vector<1x128x512xbf16>
    %78 = vector.shape_cast %77 : vector<1x128x512xbf16> to vector<128x512xbf16>
    %cst_32 = arith.constant dense<0.000000e+00> : vector<16x512xf32>
    %79 = tpu.matmul %76, %78, %cst_32 {dimension_numbers = #tpu.dot_dimension_numbers<[1], [0], [0], [1], [0, 0, 1, 1], [], []>} : vector<16x128xbf16>, vector<128x512xbf16>, vector<16x512xf32> -> vector<16x512xf32>
    %cst_33 = arith.constant 14.2857141 : f32
    %80 = vector.broadcast %cst_33 : f32 to vector<16x512xf32>
    %81 = arith.mulf %79, %80 : vector<16x512xf32>
    %82 = vector.extract_strided_slice %81 {offsets = [0, 0], sizes = [8, 512], strides = [1, 1]} : vector<16x512xf32> to vector<8x512xf32>
    %c2_34 = arith.constant 2 : index
    %c0_35 = arith.constant 0 : index
    %c0_36 = arith.constant 0 : index
    %83 = vector.load %arg3[%c2_34, %c0_35, %c0_36] : memref<6x8x512xf32, #tpu.memory_space<vmem>>, vector<1x8x512xf32>
    %84 = vector.shape_cast %83 : vector<1x8x512xf32> to vector<8x512xf32>
    %85 = vector.shape_cast %82 : vector<8x512xf32> to vector<1x8x512xf32>
    tpu.vector_store %arg3[%c2_34, %c0_35, %c0_36], %85 {strides = array<i32>} : memref<6x8x512xf32, #tpu.memory_space<vmem>>, vector<1x8x512xf32>,
    %86 = vector.extract_strided_slice %81 {offsets = [8, 0], sizes = [8, 512], strides = [1, 1]} : vector<16x512xf32> to vector<8x512xf32>
    %c5_37 = arith.constant 5 : index
    %c0_38 = arith.constant 0 : index
    %c0_39 = arith.constant 0 : index
    %87 = vector.load %arg3[%c5_37, %c0_38, %c0_39] : memref<6x8x512xf32, #tpu.memory_space<vmem>>, vector<1x8x512xf32>
    %88 = vector.shape_cast %87 : vector<1x8x512xf32> to vector<8x512xf32>
    %89 = vector.shape_cast %86 : vector<8x512xf32> to vector<1x8x512xf32>
    tpu.vector_store %arg3[%c5_37, %c0_38, %c0_39], %89 {strides = array<i32>} : memref<6x8x512xf32, #tpu.memory_space<vmem>>, vector<1x8x512xf32>,
    %90 = tpu.concatenate %75, %72 in 0 : vector<8x128xbf16>, vector<8x128xbf16> -> vector<16x128xbf16>
    %c1_40 = arith.constant 1 : index
    %c0_41 = arith.constant 0 : index
    %c0_42 = arith.constant 0 : index
    %91 = vector.load %arg1[%c1_40, %c0_41, %c0_42] : memref<4x128x512xbf16, #tpu.memory_space<vmem>>, vector<1x128x512xbf16>
    %92 = vector.shape_cast %91 : vector<1x128x512xbf16> to vector<128x512xbf16>
    %cst_43 = arith.constant dense<0.000000e+00> : vector<16x512xf32>
    %93 = tpu.matmul %90, %92, %cst_43 {dimension_numbers = #tpu.dot_dimension_numbers<[1], [0], [0], [1], [0, 0, 1, 1], [], []>} : vector<16x128xbf16>, vector<128x512xbf16>, vector<16x512xf32> -> vector<16x512xf32>
    %cst_44 = arith.constant 14.2857141 : f32
    %94 = vector.broadcast %cst_44 : f32 to vector<16x512xf32>
    %95 = arith.mulf %93, %94 : vector<16x512xf32>
    %96 = vector.extract_strided_slice %95 {offsets = [0, 0], sizes = [8, 512], strides = [1, 1]} : vector<16x512xf32> to vector<8x512xf32>
    %c3_45 = arith.constant 3 : index
    %c0_46 = arith.constant 0 : index
    %c0_47 = arith.constant 0 : index
    %97 = vector.load %arg3[%c3_45, %c0_46, %c0_47] : memref<6x8x512xf32, #tpu.memory_space<vmem>>, vector<1x8x512xf32>
    %98 = vector.shape_cast %97 : vector<1x8x512xf32> to vector<8x512xf32>
    %99 = vector.shape_cast %96 : vector<8x512xf32> to vector<1x8x512xf32>
    tpu.vector_store %arg3[%c3_45, %c0_46, %c0_47], %99 {strides = array<i32>} : memref<6x8x512xf32, #tpu.memory_space<vmem>>, vector<1x8x512xf32>,
    %100 = vector.extract_strided_slice %95 {offsets = [8, 0], sizes = [8, 512], strides = [1, 1]} : vector<16x512xf32> to vector<8x512xf32>
    %c4_48 = arith.constant 4 : index
    %c0_49 = arith.constant 0 : index
    %c0_50 = arith.constant 0 : index
    %101 = vector.load %arg3[%c4_48, %c0_49, %c0_50] : memref<6x8x512xf32, #tpu.memory_space<vmem>>, vector<1x8x512xf32>
    %102 = vector.shape_cast %101 : vector<1x8x512xf32> to vector<8x512xf32>
    %103 = vector.shape_cast %100 : vector<8x512xf32> to vector<1x8x512xf32>
    tpu.vector_store %arg3[%c4_48, %c0_49, %c0_50], %103 {strides = array<i32>} : memref<6x8x512xf32, #tpu.memory_space<vmem>>, vector<1x8x512xf32>,
    %c2_51 = arith.constant 2 : index
    %c0_52 = arith.constant 0 : index
    %c0_53 = arith.constant 0 : index
    %104 = vector.load %arg1[%c2_51, %c0_52, %c0_53] : memref<4x128x512xbf16, #tpu.memory_space<vmem>>, vector<1x128x512xbf16>
    %105 = vector.shape_cast %104 : vector<1x128x512xbf16> to vector<128x512xbf16>
    %cst_54 = arith.constant dense<0.000000e+00> : vector<8x512xf32>
    %106 = tpu.matmul %72, %105, %cst_54 {dimension_numbers = #tpu.dot_dimension_numbers<[1], [0], [0], [1], [0, 0, 1, 1], [], []>} : vector<8x128xbf16>, vector<128x512xbf16>, vector<8x512xf32> -> vector<8x512xf32>
    %cst_55 = arith.constant 14.2857141 : f32
    %107 = vector.broadcast %cst_55 : f32 to vector<8x512xf32>
    %108 = arith.mulf %106, %107 : vector<8x512xf32>
    %c0_56 = arith.constant 0 : index
    %c0_57 = arith.constant 0 : index
    %c0_58 = arith.constant 0 : index
    %109 = vector.load %arg3[%c0_56, %c0_57, %c0_58] : memref<6x8x512xf32, #tpu.memory_space<vmem>>, vector<1x8x512xf32>
    %110 = vector.shape_cast %109 : vector<1x8x512xf32> to vector<8x512xf32>
    %111 = vector.shape_cast %108 : vector<8x512xf32> to vector<1x8x512xf32>
    tpu.vector_store %arg3[%c0_56, %c0_57, %c0_58], %111 {strides = array<i32>} : memref<6x8x512xf32, #tpu.memory_space<vmem>>, vector<1x8x512xf32>,
    %c3_59 = arith.constant 3 : index
    %c0_60 = arith.constant 0 : index
    %c0_61 = arith.constant 0 : index
    %112 = vector.load %arg1[%c3_59, %c0_60, %c0_61] : memref<4x128x512xbf16, #tpu.memory_space<vmem>>, vector<1x128x512xbf16>
    %113 = vector.shape_cast %112 : vector<1x128x512xbf16> to vector<128x512xbf16>
    %cst_62 = arith.constant dense<0.000000e+00> : vector<8x512xf32>
    %114 = tpu.matmul %73, %113, %cst_62 {dimension_numbers = #tpu.dot_dimension_numbers<[1], [0], [0], [1], [0, 0, 1, 1], [], []>} : vector<8x128xbf16>, vector<128x512xbf16>, vector<8x512xf32> -> vector<8x512xf32>
    %cst_63 = arith.constant 14.2857141 : f32
    %115 = vector.broadcast %cst_63 : f32 to vector<8x512xf32>
    %116 = arith.mulf %114, %115 : vector<8x512xf32>
    %c1_64 = arith.constant 1 : index
    %c0_65 = arith.constant 0 : index
    %c0_66 = arith.constant 0 : index
    %117 = vector.load %arg3[%c1_64, %c0_65, %c0_66] : memref<6x8x512xf32, #tpu.memory_space<vmem>>, vector<1x8x512xf32>
    %118 = vector.shape_cast %117 : vector<1x8x512xf32> to vector<8x512xf32>
    %119 = vector.shape_cast %116 : vector<8x512xf32> to vector<1x8x512xf32>
    tpu.vector_store %arg3[%c1_64, %c0_65, %c0_66], %119 {strides = array<i32>} : memref<6x8x512xf32, #tpu.memory_space<vmem>>, vector<1x8x512xf32>,
    return
  }
}

</mosaic_0001>

<llo_original>
// kernel: stda_forward.3
$region0: #{stda_forward.3}
  #allocation0 [shape = 'u32[]', space=smem, size = 0x4, offset = 0x4, fixed_abs, tag = 'smem constant byte address 0x4 - core index']
  #allocation1 [shape = 'u32[144,128]{1,0:T(1,128)}', space=vmem, size = 0x12000, scoped, tag = 'internal scratch']
  %s0 = inlined_call_operand.vmem [shape: f32[2,8,512], index: 0, kind: input, shape index: {}]
  %s1 = inlined_call_operand.vmem [shape: bf16[4,128,512], index: 1, kind: input, shape index: {}]
  %s2 = inlined_call_operand.vmem [shape: f32[6,8,128], index: 2, kind: output, shape index: {0}]
  %s3 = inlined_call_operand.vmem [shape: f32[6,8,512], index: 3, kind: output, shape index: {1}]
  %4 = xla_tuple %s2, %s3
  %s5 = sld [smem:[#allocation0]]
  $region26: #{stda_forward.3} parent=0
    _
  %s7 = ssub.s32 1, %s5
  %s8 = scalar_select 0, %s7, %s5
  // Predicated region
  $region2: #{stda_forward.3} parent=0 // pred_check
    _
  $region3: #{stda_forward.3} parent=0 // pred_check_branch
    %10 = sbr.rel (0) target = $region5
  $region4: #{stda_forward.3} parent=0 // pred_region
    _
  $region5: #{stda_forward.3} parent=0 // pred_fallthru
    _
  // Predicated region
  $region6: #{stda_forward.3} parent=0 // pred_check
    _
  $region7: #{stda_forward.3} parent=0 // pred_check_branch
    %12 = sbr.rel (0) target = $region9
  $region8: #{stda_forward.3} parent=0 // pred_region
    _
  $region9: #{stda_forward.3} parent=0 // pred_fallthru
    _
  %v14 = vld [vmem:[%s0] sm:$0xff]
  %v15 = vld [vmem:[%s0 + $0x8] sm:$0xff]
  %v16 = vld [vmem:[%s0 + $0x10] sm:$0xff]
  %v17 = vld [vmem:[%s0 + $0x18] sm:$0xff]
  %s18 = scalar_lea.vmem %s0, 32
  %v19 = vld [vmem:[%s18] sm:$0xff]
  %v20 = vld [vmem:[%s18 + $0x8] sm:$0xff]
  %v21 = vld [vmem:[%s18 + $0x10] sm:$0xff]
  %v22 = vld [vmem:[%s18 + $0x18] sm:$0xff]
  %v23 = vmul.f32 %v14, %v21
  %24 = vadd.xlane.f32.xlu0 %v23
  %v25 = vpop.xlane.xlu0 %24
  %v26 = vmul.f32 %v25, 14.285714
  %27 = vst [vmem:[%s2] sm:$0xff] %v26
  %v28 = vmul.f32 %v15, %v22
  %29 = vadd.xlane.f32.xlu0 %v28
  %v30 = vpop.xlane.xlu0 %29
  %v31 = vmul.f32 %v30, 14.285714
  %s32 = scalar_lea.vmem %s2, 8
  %33 = vst [vmem:[%s32] sm:$0xff] %v31
  %v34 = vmul.f32 %v16, %v19
  %35 = vadd.xlane.f32.xlu0 %v34
  %v36 = vpop.xlane.xlu0 %35
  %v37 = vmul.f32 %v36, 14.285714
  %s38 = scalar_lea.vmem %s2, 16
  %39 = vst [vmem:[%s38] sm:$0xff] %v37
  %v40 = vmul.f32 %v17, %v20
  %41 = vadd.xlane.f32.xlu0 %v40
  %v42 = vpop.xlane.xlu0 %41
  %v43 = vmul.f32 %v42, 14.285714
  %s44 = scalar_lea.vmem %s2, 24
  %45 = vst [vmem:[%s44] sm:$0xff] %v43
  %v46 = vmul.f32 %v14, %v20
  %47 = vadd.xlane.f32.xlu0 %v46
  %v48 = vpop.xlane.xlu0 %47
  %v49 = vmul.f32 %v48, 14.285714
  %s50 = scalar_lea.vmem %s2, 32
  %51 = vst [vmem:[%s50] sm:$0xff] %v49
  %v52 = vmul.f32 %v15, %v19
  %53 = vadd.xlane.f32.xlu0 %v52
  %v54 = vpop.xlane.xlu0 %53
  %v55 = vmul.f32 %v54, 14.285714
  %s56 = scalar_lea.vmem %s2, 40
  %57 = vst [vmem:[%s56] sm:$0xff] %v55
  %v58 = vpack.c.bf16 %v14, %v14
  %v59 = vpack.c.bf16 %v15, %v15
  %v60 = vpack.c.bf16 %v16, %v16
  %v61 = vpack.c.bf16 %v17, %v17
  %v63 = vrot.slane %v59, 4
  %vm64 = vcmask 1043456
  %v67 = vsel %vm64, %v60, %v63
  %v69 = vld [vmem:[%s1] sm:$0xff]
  %v70 = vld [vmem:[%s1 + $0x8] sm:$0xff]
  %v71 = vld [vmem:[%s1 + $0x10] sm:$0xff]
  %v72 = vld [vmem:[%s1 + $0x18] sm:$0xff]
  %v73 = vld [vmem:[%s1 + $0x20] sm:$0xff]
  %v74 = vld [vmem:[%s1 + $0x28] sm:$0xff]
  %v75 = vld [vmem:[%s1 + $0x30] sm:$0xff]
  %v76 = vld [vmem:[%s1 + $0x38] sm:$0xff]
  %v77 = vld [vmem:[%s1 + $0x40] sm:$0xff]
  %v78 = vld [vmem:[%s1 + $0x48] sm:$0xff]
  %v79 = vld [vmem:[%s1 + $0x50] sm:$0xff]
  %v80 = vld [vmem:[%s1 + $0x58] sm:$0xff]
  %v81 = vld [vmem:[%s1 + $0x60] sm:$0xff]
  %v82 = vld [vmem:[%s1 + $0x68] sm:$0xff]
  %v83 = vld [vmem:[%s1 + $0x70] sm:$0xff]
  %v84 = vld [vmem:[%s1 + $0x78] sm:$0xff]
  %v85 = vld [vmem:[%s1 + $0x80] sm:$0xff]
  %v86 = vld [vmem:[%s1 + $0x88] sm:$0xff]
  %v87 = vld [vmem:[%s1 + $0x90] sm:$0xff]
  %v88 = vld [vmem:[%s1 + $0x98] sm:$0xff]
  %v89 = vld [vmem:[%s1 + $0xa0] sm:$0xff]
  %v90 = vld [vmem:[%s1 + $0xa8] sm:$0xff]
  %v91 = vld [vmem:[%s1 + $0xb0] sm:$0xff]
  %v92 = vld [vmem:[%s1 + $0xb8] sm:$0xff]
  %v93 = vld [vmem:[%s1 + $0xc0] sm:$0xff]
  %v94 = vld [vmem:[%s1 + $0xc8] sm:$0xff]
  %v95 = vld [vmem:[%s1 + $0xd0] sm:$0xff]
  %v96 = vld [vmem:[%s1 + $0xd8] sm:$0xff]
  %v97 = vld [vmem:[%s1 + $0xe0] sm:$0xff]
  %v98 = vld [vmem:[%s1 + $0xe8] sm:$0xff]
  %v99 = vld [vmem:[%s1 + $0xf0] sm:$0xff]
  %v100 = vld [vmem:[%s1 + $0xf8] sm:$0xff]
  %v133 = vunpack.c.l.b16 %v69
  %v134 = vunpack.c.h.b16 %v69
  %v135 = vunpack.c.l.b16 %v70
  %v136 = vunpack.c.h.b16 %v70
  %v137 = vunpack.c.l.b16 %v71
  %v138 = vunpack.c.h.b16 %v71
  %v139 = vunpack.c.l.b16 %v72
  %v140 = vunpack.c.h.b16 %v72
  %v141 = vunpack.c.l.b16 %v73
  %v142 = vunpack.c.h.b16 %v73
  %v143 = vunpack.c.l.b16 %v74
  %v144 = vunpack.c.h.b16 %v74
  %v145 = vunpack.c.l.b16 %v75
  %v146 = vunpack.c.h.b16 %v75
  %v147 = vunpack.c.l.b16 %v76
  %v148 = vunpack.c.h.b16 %v76
  %v149 = vunpack.c.l.b16 %v77
  %v150 = vunpack.c.h.b16 %v77
  %v151 = vunpack.c.l.b16 %v78
  %v152 = vunpack.c.h.b16 %v78
  %v153 = vunpack.c.l.b16 %v79
  %v154 = vunpack.c.h.b16 %v79
  %v155 = vunpack.c.l.b16 %v80
  %v156 = vunpack.c.h.b16 %v80
  %v157 = vunpack.c.l.b16 %v81
  %v158 = vunpack.c.h.b16 %v81
  %v159 = vunpack.c.l.b16 %v82
  %v160 = vunpack.c.h.b16 %v82
  %v161 = vunpack.c.l.b16 %v83
  %v162 = vunpack.c.h.b16 %v83
  %v163 = vunpack.c.l.b16 %v84
  %v164 = vunpack.c.h.b16 %v84
  %v165 = vunpack.c.l.b16 %v85
  %v166 = vunpack.c.h.b16 %v85
  %v167 = vunpack.c.l.b16 %v86
  %v168 = vunpack.c.h.b16 %v86
  %v169 = vunpack.c.l.b16 %v87
  %v170 = vunpack.c.h.b16 %v87
  %v171 = vunpack.c.l.b16 %v88
  %v172 = vunpack.c.h.b16 %v88
  %v173 = vunpack.c.l.b16 %v89
  %v174 = vunpack.c.h.b16 %v89
  %v175 = vunpack.c.l.b16 %v90
  %v176 = vunpack.c.h.b16 %v90
  %v177 = vunpack.c.l.b16 %v91
  %v178 = vunpack.c.h.b16 %v91
  %v179 = vunpack.c.l.b16 %v92
  %v180 = vunpack.c.h.b16 %v92
  %v181 = vunpack.c.l.b16 %v93
  %v182 = vunpack.c.h.b16 %v93
  %v183 = vunpack.c.l.b16 %v94
  %v184 = vunpack.c.h.b16 %v94
  %v185 = vunpack.c.l.b16 %v95
  %v186 = vunpack.c.h.b16 %v95
  %v187 = vunpack.c.l.b16 %v96
  %v188 = vunpack.c.h.b16 %v96
  %v189 = vunpack.c.l.b16 %v97
  %v190 = vunpack.c.h.b16 %v97
  %v191 = vunpack.c.l.b16 %v98
  %v192 = vunpack.c.h.b16 %v98
  %v193 = vunpack.c.l.b16 %v99
  %v194 = vunpack.c.h.b16 %v99
  %v195 = vunpack.c.l.b16 %v100
  %v196 = vunpack.c.h.b16 %v100
  %v197 = vpack.c.b16 %v137, %v133
  %v198 = vpack.c.b16 %v138, %v134
  %v199 = vpack.c.b16 %v139, %v135
  %v200 = vpack.c.b16 %v140, %v136
  %v201 = vpack.c.b16 %v145, %v141
  %v202 = vpack.c.b16 %v146, %v142
  %v203 = vpack.c.b16 %v147, %v143
  %v204 = vpack.c.b16 %v148, %v144
  %v205 = vpack.c.b16 %v153, %v149
  %v206 = vpack.c.b16 %v154, %v150
  %v207 = vpack.c.b16 %v155, %v151
  %v208 = vpack.c.b16 %v156, %v152
  %v209 = vpack.c.b16 %v161, %v157
  %v210 = vpack.c.b16 %v162, %v158
  %v211 = vpack.c.b16 %v163, %v159
  %v212 = vpack.c.b16 %v164, %v160
  %v213 = vpack.c.b16 %v169, %v165
  %v214 = vpack.c.b16 %v170, %v166
  %v215 = vpack.c.b16 %v171, %v167
  %v216 = vpack.c.b16 %v172, %v168
  %v217 = vpack.c.b16 %v177, %v173
  %v218 = vpack.c.b16 %v178, %v174
  %v219 = vpack.c.b16 %v179, %v175
  %v220 = vpack.c.b16 %v180, %v176
  %v221 = vpack.c.b16 %v185, %v181
  %v222 = vpack.c.b16 %v186, %v182
  %v223 = vpack.c.b16 %v187, %v183
  %v224 = vpack.c.b16 %v188, %v184
  %v225 = vpack.c.b16 %v193, %v189
  %v226 = vpack.c.b16 %v194, %v190
  %v227 = vpack.c.b16 %v195, %v191
  %v228 = vpack.c.b16 %v196, %v192
  %261 = vmatprep.subr.bf16.mxu0 %v198
  %262 = vmatpush1.bf16.msra.mxu0 %v197
  %263 = vmatprep.subr.bf16.mxu0 %v202
  %264 = vmatpush1.bf16.msra.mxu0 %v201
  %265 = vmatprep.subr.bf16.mxu0 %v206
  %266 = vmatpush1.bf16.msra.mxu0 %v205
  %267 = vmatprep.subr.bf16.mxu0 %v210
  %268 = vmatpush1.bf16.msra.mxu0 %v209
  %269 = vmatprep.subr.bf16.mxu0 %v214
  %270 = vmatpush1.bf16.msra.mxu0 %v213
  %271 = vmatprep.subr.bf16.mxu0 %v218
  %272 = vmatpush1.bf16.msra.mxu0 %v217
  %273 = vmatprep.subr.bf16.mxu0 %v222
  %274 = vmatpush1.bf16.msra.mxu0 %v221
  %275 = vmatprep.subr.bf16.mxu0 %v226
  %276 = vmatpush1.bf16.msra.mxu0 %v225
  %277 = vmatprep.subr.bf16.mxu0 0
  %278 = vmatpush1.bf16.msra.mxu0 0
  %279 = vmatprep.subr.bf16.mxu0 0
  %280 = vmatpush1.bf16.msra.mxu0 0
  %281 = vmatprep.subr.bf16.mxu0 0
  %282 = vmatpush1.bf16.msra.mxu0 0
  %283 = vmatprep.subr.bf16.mxu0 0
  %284 = vmatpush1.bf16.msra.mxu0 0
  %285 = vmatprep.subr.bf16.mxu0 0
  %286 = vmatpush1.bf16.msra.mxu0 0
  %287 = vmatprep.subr.bf16.mxu0 0
  %288 = vmatpush1.bf16.msra.mxu0 0
  %289 = vmatprep.subr.bf16.mxu0 0
  %290 = vmatpush1.bf16.msra.mxu0 0
  %291 = vmatprep.subr.bf16.mxu0 0
  %292 = vmatpush1.bf16.msra.mxu0 0
  %293 = vmatprep.mubr.bf16.mxu0 0
  %294 = vmatmul.mubr.bf16.gmra.mrb[0].mxu0 %v67
  %v295 = vpop.f32.mrb[0].mxu0
  %v296 = vadd.f32 0.0, %v295
  %v297 = vpop.f32.mrb[0].mxu0
  %v298 = vadd.f32 0.0, %v297
  %v299 = vpop.f32.mrb[0].mxu0
  %v300 = vadd.f32 0.0, %v299
  %v301 = vpop.f32.mrb[0].mxu0
  %v302 = vadd.f32 0.0, %v301
  %303 = vdwg.mxu0
  %304 = vmatprep.subr.bf16.mxu0 %v200
  %305 = vmatpush1.bf16.msra.mxu0 %v199
  %306 = vmatprep.subr.bf16.mxu0 %v204
  %307 = vmatpush1.bf16.msra.mxu0 %v203
  %308 = vmatprep.subr.bf16.mxu0 %v208
  %309 = vmatpush1.bf16.msra.mxu0 %v207
  %310 = vmatprep.subr.bf16.mxu0 %v212
  %311 = vmatpush1.bf16.msra.mxu0 %v211
  %312 = vmatprep.subr.bf16.mxu0 %v216
  %313 = vmatpush1.bf16.msra.mxu0 %v215
  %314 = vmatprep.subr.bf16.mxu0 %v220
  %315 = vmatpush1.bf16.msra.mxu0 %v219
  %316 = vmatprep.subr.bf16.mxu0 %v224
  %317 = vmatpush1.bf16.msra.mxu0 %v223
  %318 = vmatprep.subr.bf16.mxu0 %v228
  %319 = vmatpush1.bf16.msra.mxu0 %v227
  %320 = vmatprep.subr.bf16.mxu0 0
  %321 = vmatpush1.bf16.msra.mxu0 0
  %322 = vmatprep.subr.bf16.mxu0 0
  %323 = vmatpush1.bf16.msra.mxu0 0
  %324 = vmatprep.subr.bf16.mxu0 0
  %325 = vmatpush1.bf16.msra.mxu0 0
  %326 = vmatprep.subr.bf16.mxu0 0
  %327 = vmatpush1.bf16.msra.mxu0 0
  %328 = vmatprep.subr.bf16.mxu0 0
  %329 = vmatpush1.bf16.msra.mxu0 0
  %330 = vmatprep.subr.bf16.mxu0 0
  %331 = vmatpush1.bf16.msra.mxu0 0
  %332 = vmatprep.subr.bf16.mxu0 0
  %333 = vmatpush1.bf16.msra.mxu0 0
  %334 = vmatprep.subr.bf16.mxu0 0
  %335 = vmatpush1.bf16.msra.mxu0 0
  %336 = vmatprep.mubr.bf16.mxu0 0
  %337 = vmatmul.mubr.bf16.gmra.mrb[0].mxu0 %v67
  %v338 = vpop.f32.mrb[0].mxu0
  %v339 = vadd.f32 0.0, %v338
  %v340 = vpop.f32.mrb[0].mxu0
  %v341 = vadd.f32 0.0, %v340
  %v342 = vpop.f32.mrb[0].mxu0
  %v343 = vadd.f32 0.0, %v342
  %v344 = vpop.f32.mrb[0].mxu0
  %v345 = vadd.f32 0.0, %v344
  %346 = vdwg.mxu0
  %v347 = vmul.f32 %v296, 14.285714
  %v348 = vmul.f32 %v298, 14.285714
  %v349 = vmul.f32 %v339, 14.285714
  %v350 = vmul.f32 %v341, 14.285714
  %v351 = vmul.f32 %v300, 14.285714
  %v352 = vmul.f32 %v302, 14.285714
  %v353 = vmul.f32 %v343, 14.285714
  %v354 = vmul.f32 %v345, 14.285714
  %s355 = scalar_lea.vmem %s3, 64
  %356 = vst [vmem:[%s355] sm:$0xff] %v347
  %357 = vst [vmem:[%s355 + $0x8] sm:$0xff] %v348
  %358 = vst [vmem:[%s355 + $0x10] sm:$0xff] %v349
  %359 = vst [vmem:[%s355 + $0x18] sm:$0xff] %v350
  %s360 = scalar_lea.vmem %s3, 160
  %361 = vst [vmem:[%s360] sm:$0xff] %v351
  %362 = vst [vmem:[%s360 + $0x8] sm:$0xff] %v352
  %363 = vst [vmem:[%s360 + $0x10] sm:$0xff] %v353
  %364 = vst [vmem:[%s360 + $0x18] sm:$0xff] %v354
  %v366 = vrot.slane %v58, 4
  %v369 = vsel %vm64, %v61, %v366
  %s371 = scalar_lea.vmem %s1, 256
  %v372 = vld [vmem:[%s371] sm:$0xff]
  %v373 = vld [vmem:[%s371 + $0x8] sm:$0xff]
  %v374 = vld [vmem:[%s371 + $0x10] sm:$0xff]
  %v375 = vld [vmem:[%s371 + $0x18] sm:$0xff]
  %v376 = vld [vmem:[%s371 + $0x20] sm:$0xff]
  %v377 = vld [vmem:[%s371 + $0x28] sm:$0xff]
  %v378 = vld [vmem:[%s371 + $0x30] sm:$0xff]
  %v379 = vld [vmem:[%s371 + $0x38] sm:$0xff]
  %v380 = vld [vmem:[%s371 + $0x40] sm:$0xff]
  %v381 = vld [vmem:[%s371 + $0x48] sm:$0xff]
  %v382 = vld [vmem:[%s371 + $0x50] sm:$0xff]
  %v383 = vld [vmem:[%s371 + $0x58] sm:$0xff]
  %v384 = vld [vmem:[%s371 + $0x60] sm:$0xff]
  %v385 = vld [vmem:[%s371 + $0x68] sm:$0xff]
  %v386 = vld [vmem:[%s371 + $0x70] sm:$0xff]
  %v387 = vld [vmem:[%s371 + $0x78] sm:$0xff]
  %v388 = vld [vmem:[%s371 + $0x80] sm:$0xff]
  %v389 = vld [vmem:[%s371 + $0x88] sm:$0xff]
  %v390 = vld [vmem:[%s371 + $0x90] sm:$0xff]
  %v391 = vld [vmem:[%s371 + $0x98] sm:$0xff]
  %v392 = vld [vmem:[%s371 + $0xa0] sm:$0xff]
  %v393 = vld [vmem:[%s371 + $0xa8] sm:$0xff]
  %v394 = vld [vmem:[%s371 + $0xb0] sm:$0xff]
  %v395 = vld [vmem:[%s371 + $0xb8] sm:$0xff]
  %v396 = vld [vmem:[%s371 + $0xc0] sm:$0xff]
  %v397 = vld [vmem:[%s371 + $0xc8] sm:$0xff]
  %v398 = vld [vmem:[%s371 + $0xd0] sm:$0xff]
  %v399 = vld [vmem:[%s371 + $0xd8] sm:$0xff]
  %v400 = vld [vmem:[%s371 + $0xe0] sm:$0xff]
  %v401 = vld [vmem:[%s371 + $0xe8] sm:$0xff]
  %v402 = vld [vmem:[%s371 + $0xf0] sm:$0xff]
  %v403 = vld [vmem:[%s371 + $0xf8] sm:$0xff]
  %v436 = vunpack.c.l.b16 %v372
  %v437 = vunpack.c.h.b16 %v372
  %v438 = vunpack.c.l.b16 %v373
  %v439 = vunpack.c.h.b16 %v373
  %v440 = vunpack.c.l.b16 %v374
  %v441 = vunpack.c.h.b16 %v374
  %v442 = vunpack.c.l.b16 %v375
  %v443 = vunpack.c.h.b16 %v375
  %v444 = vunpack.c.l.b16 %v376
  %v445 = vunpack.c.h.b16 %v376
  %v446 = vunpack.c.l.b16 %v377
  %v447 = vunpack.c.h.b16 %v377
  %v448 = vunpack.c.l.b16 %v378
  %v449 = vunpack.c.h.b16 %v378
  %v450 = vunpack.c.l.b16 %v379
  %v451 = vunpack.c.h.b16 %v379
  %v452 = vunpack.c.l.b16 %v380
  %v453 = vunpack.c.h.b16 %v380
  %v454 = vunpack.c.l.b16 %v381
  %v455 = vunpack.c.h.b16 %v381
  %v456 = vunpack.c.l.b16 %v382
  %v457 = vunpack.c.h.b16 %v382
  %v458 = vunpack.c.l.b16 %v383
  %v459 = vunpack.c.h.b16 %v383
  %v460 = vunpack.c.l.b16 %v384
  %v461 = vunpack.c.h.b16 %v384
  %v462 = vunpack.c.l.b16 %v385
  %v463 = vunpack.c.h.b16 %v385
  %v464 = vunpack.c.l.b16 %v386
  %v465 = vunpack.c.h.b16 %v386
  %v466 = vunpack.c.l.b16 %v387
  %v467 = vunpack.c.h.b16 %v387
  %v468 = vunpack.c.l.b16 %v388
  %v469 = vunpack.c.h.b16 %v388
  %v470 = vunpack.c.l.b16 %v389
  %v471 = vunpack.c.h.b16 %v389
  %v472 = vunpack.c.l.b16 %v390
  %v473 = vunpack.c.h.b16 %v390
  %v474 = vunpack.c.l.b16 %v391
  %v475 = vunpack.c.h.b16 %v391
  %v476 = vunpack.c.l.b16 %v392
  %v477 = vunpack.c.h.b16 %v392
  %v478 = vunpack.c.l.b16 %v393
  %v479 = vunpack.c.h.b16 %v393
  %v480 = vunpack.c.l.b16 %v394
  %v481 = vunpack.c.h.b16 %v394
  %v482 = vunpack.c.l.b16 %v395
  %v483 = vunpack.c.h.b16 %v395
  %v484 = vunpack.c.l.b16 %v396
  %v485 = vunpack.c.h.b16 %v396
  %v486 = vunpack.c.l.b16 %v397
  %v487 = vunpack.c.h.b16 %v397
  %v488 = vunpack.c.l.b16 %v398
  %v489 = vunpack.c.h.b16 %v398
  %v490 = vunpack.c.l.b16 %v399
  %v491 = vunpack.c.h.b16 %v399
  %v492 = vunpack.c.l.b16 %v400
  %v493 = vunpack.c.h.b16 %v400
  %v494 = vunpack.c.l.b16 %v401
  %v495 = vunpack.c.h.b16 %v401
  %v496 = vunpack.c.l.b16 %v402
  %v497 = vunpack.c.h.b16 %v402
  %v498 = vunpack.c.l.b16 %v403
  %v499 = vunpack.c.h.b16 %v403
  %v500 = vpack.c.b16 %v440, %v436
  %v501 = vpack.c.b16 %v441, %v437
  %v502 = vpack.c.b16 %v442, %v438
  %v503 = vpack.c.b16 %v443, %v439
  %v504 = vpack.c.b16 %v448, %v444
  %v505 = vpack.c.b16 %v449, %v445
  %v506 = vpack.c.b16 %v450, %v446
  %v507 = vpack.c.b16 %v451, %v447
  %v508 = vpack.c.b16 %v456, %v452
  %v509 = vpack.c.b16 %v457, %v453
  %v510 = vpack.c.b16 %v458, %v454
  %v511 = vpack.c.b16 %v459, %v455
  %v512 = vpack.c.b16 %v464, %v460
  %v513 = vpack.c.b16 %v465, %v461
  %v514 = vpack.c.b16 %v466, %v462
  %v515 = vpack.c.b16 %v467, %v463
  %v516 = vpack.c.b16 %v472, %v468
  %v517 = vpack.c.b16 %v473, %v469
  %v518 = vpack.c.b16 %v474, %v470
  %v519 = vpack.c.b16 %v475, %v471
  %v520 = vpack.c.b16 %v480, %v476
  %v521 = vpack.c.b16 %v481, %v477
  %v522 = vpack.c.b16 %v482, %v478
  %v523 = vpack.c.b16 %v483, %v479
  %v524 = vpack.c.b16 %v488, %v484
  %v525 = vpack.c.b16 %v489, %v485
  %v526 = vpack.c.b16 %v490, %v486
  %v527 = vpack.c.b16 %v491, %v487
  %v528 = vpack.c.b16 %v496, %v492
  %v529 = vpack.c.b16 %v497, %v493
  %v530 = vpack.c.b16 %v498, %v494
  %v531 = vpack.c.b16 %v499, %v495
  %564 = vmatprep.subr.bf16.mxu0 %v501
  %565 = vmatpush1.bf16.msra.mxu0 %v500
  %566 = vmatprep.subr.bf16.mxu0 %v505
  %567 = vmatpush1.bf16.msra.mxu0 %v504
  %568 = vmatprep.subr.bf16.mxu0 %v509
  %569 = vmatpush1.bf16.msra.mxu0 %v508
  %570 = vmatprep.subr.bf16.mxu0 %v513
  %571 = vmatpush1.bf16.msra.mxu0 %v512
  %572 = vmatprep.subr.bf16.mxu0 %v517
  %573 = vmatpush1.bf16.msra.mxu0 %v516
  %574 = vmatprep.subr.bf16.mxu0 %v521
  %575 = vmatpush1.bf16.msra.mxu0 %v520
  %576 = vmatprep.subr.bf16.mxu0 %v525
  %577 = vmatpush1.bf16.msra.mxu0 %v524
  %578 = vmatprep.subr.bf16.mxu0 %v529
  %579 = vmatpush1.bf16.msra.mxu0 %v528
  %580 = vmatprep.subr.bf16.mxu0 0
  %581 = vmatpush1.bf16.msra.mxu0 0
  %582 = vmatprep.subr.bf16.mxu0 0
  %583 = vmatpush1.bf16.msra.mxu0 0
  %584 = vmatprep.subr.bf16.mxu0 0
  %585 = vmatpush1.bf16.msra.mxu0 0
  %586 = vmatprep.subr.bf16.mxu0 0
  %587 = vmatpush1.bf16.msra.mxu0 0
  %588 = vmatprep.subr.bf16.mxu0 0
  %589 = vmatpush1.bf16.msra.mxu0 0
  %590 = vmatprep.subr.bf16.mxu0 0
  %591 = vmatpush1.bf16.msra.mxu0 0
  %592 = vmatprep.subr.bf16.mxu0 0
  %593 = vmatpush1.bf16.msra.mxu0 0
  %594 = vmatprep.subr.bf16.mxu0 0
  %595 = vmatpush1.bf16.msra.mxu0 0
  %596 = vmatprep.mubr.bf16.mxu0 0
  %597 = vmatmul.mubr.bf16.gmra.mrb[0].mxu0 %v369
  %v598 = vpop.f32.mrb[0].mxu0
  %v599 = vadd.f32 0.0, %v598
  %v600 = vpop.f32.mrb[0].mxu0
  %v601 = vadd.f32 0.0, %v600
  %v602 = vpop.f32.mrb[0].mxu0
  %v603 = vadd.f32 0.0, %v602
  %v604 = vpop.f32.mrb[0].mxu0
  %v605 = vadd.f32 0.0, %v604
  %606 = vdwg.mxu0
  %607 = vmatprep.subr.bf16.mxu0 %v503
  %608 = vmatpush1.bf16.msra.mxu0 %v502
  %609 = vmatprep.subr.bf16.mxu0 %v507
  %610 = vmatpush1.bf16.msra.mxu0 %v506
  %611 = vmatprep.subr.bf16.mxu0 %v511
  %612 = vmatpush1.bf16.msra.mxu0 %v510
  %613 = vmatprep.subr.bf16.mxu0 %v515
  %614 = vmatpush1.bf16.msra.mxu0 %v514
  %615 = vmatprep.subr.bf16.mxu0 %v519
  %616 = vmatpush1.bf16.msra.mxu0 %v518
  %617 = vmatprep.subr.bf16.mxu0 %v523
  %618 = vmatpush1.bf16.msra.mxu0 %v522
  %619 = vmatprep.subr.bf16.mxu0 %v527
  %620 = vmatpush1.bf16.msra.mxu0 %v526
  %621 = vmatprep.subr.bf16.mxu0 %v531
  %622 = vmatpush1.bf16.msra.mxu0 %v530
  %623 = vmatprep.subr.bf16.mxu0 0
  %624 = vmatpush1.bf16.msra.mxu0 0
  %625 = vmatprep.subr.bf16.mxu0 0
  %626 = vmatpush1.bf16.msra.mxu0 0
  %627 = vmatprep.subr.bf16.mxu0 0
  %628 = vmatpush1.bf16.msra.mxu0 0
  %629 = vmatprep.subr.bf16.mxu0 0
  %630 = vmatpush1.bf16.msra.mxu0 0
  %631 = vmatprep.subr.bf16.mxu0 0
  %632 = vmatpush1.bf16.msra.mxu0 0
  %633 = vmatprep.subr.bf16.mxu0 0
  %634 = vmatpush1.bf16.msra.mxu0 0
  %635 = vmatprep.subr.bf16.mxu0 0
  %636 = vmatpush1.bf16.msra.mxu0 0
  %637 = vmatprep.subr.bf16.mxu0 0
  %638 = vmatpush1.bf16.msra.mxu0 0
  %639 = vmatprep.mubr.bf16.mxu0 0
  %640 = vmatmul.mubr.bf16.gmra.mrb[0].mxu0 %v369
  %v641 = vpop.f32.mrb[0].mxu0
  %v642 = vadd.f32 0.0, %v641
  %v643 = vpop.f32.mrb[0].mxu0
  %v644 = vadd.f32 0.0, %v643
  %v645 = vpop.f32.mrb[0].mxu0
  %v646 = vadd.f32 0.0, %v645
  %v647 = vpop.f32.mrb[0].mxu0
  %v648 = vadd.f32 0.0, %v647
  %649 = vdwg.mxu0
  %v650 = vmul.f32 %v599, 14.285714
  %v651 = vmul.f32 %v601, 14.285714
  %v652 = vmul.f32 %v642, 14.285714
  %v653 = vmul.f32 %v644, 14.285714
  %v654 = vmul.f32 %v603, 14.285714
  %v655 = vmul.f32 %v605, 14.285714
  %v656 = vmul.f32 %v646, 14.285714
  %v657 = vmul.f32 %v648, 14.285714
  %s658 = scalar_lea.vmem %s3, 96
  %659 = vst [vmem:[%s658] sm:$0xff] %v650
  %660 = vst [vmem:[%s658 + $0x8] sm:$0xff] %v651
  %661 = vst [vmem:[%s658 + $0x10] sm:$0xff] %v652
  %662 = vst [vmem:[%s658 + $0x18] sm:$0xff] %v653
  %s663 = scalar_lea.vmem %s3, 128
  %664 = vst [vmem:[%s663] sm:$0xff] %v654
  %665 = vst [vmem:[%s663 + $0x8] sm:$0xff] %v655
  %666 = vst [vmem:[%s663 + $0x10] sm:$0xff] %v656
  %667 = vst [vmem:[%s663 + $0x18] sm:$0xff] %v657
  %s668 = scalar_lea.vmem %s1, 512
  %v669 = vld [vmem:[%s668] sm:$0xff]
  %v670 = vld [vmem:[%s668 + $0x8] sm:$0xff]
  %v671 = vld [vmem:[%s668 + $0x10] sm:$0xff]
  %v672 = vld [vmem:[%s668 + $0x18] sm:$0xff]
  %v673 = vld [vmem:[%s668 + $0x20] sm:$0xff]
  %v674 = vld [vmem:[%s668 + $0x28] sm:$0xff]
  %v675 = vld [vmem:[%s668 + $0x30] sm:$0xff]
  %v676 = vld [vmem:[%s668 + $0x38] sm:$0xff]
  %v677 = vld [vmem:[%s668 + $0x40] sm:$0xff]
  %v678 = vld [vmem:[%s668 + $0x48] sm:$0xff]
  %v679 = vld [vmem:[%s668 + $0x50] sm:$0xff]
  %v680 = vld [vmem:[%s668 + $0x58] sm:$0xff]
  %v681 = vld [vmem:[%s668 + $0x60] sm:$0xff]
  %v682 = vld [vmem:[%s668 + $0x68] sm:$0xff]
  %v683 = vld [vmem:[%s668 + $0x70] sm:$0xff]
  %v684 = vld [vmem:[%s668 + $0x78] sm:$0xff]
  %v685 = vld [vmem:[%s668 + $0x80] sm:$0xff]
  %v686 = vld [vmem:[%s668 + $0x88] sm:$0xff]
  %v687 = vld [vmem:[%s668 + $0x90] sm:$0xff]
  %v688 = vld [vmem:[%s668 + $0x98] sm:$0xff]
  %v689 = vld [vmem:[%s668 + $0xa0] sm:$0xff]
  %v690 = vld [vmem:[%s668 + $0xa8] sm:$0xff]
  %v691 = vld [vmem:[%s668 + $0xb0] sm:$0xff]
  %v692 = vld [vmem:[%s668 + $0xb8] sm:$0xff]
  %v693 = vld [vmem:[%s668 + $0xc0] sm:$0xff]
  %v694 = vld [vmem:[%s668 + $0xc8] sm:$0xff]
  %v695 = vld [vmem:[%s668 + $0xd0] sm:$0xff]
  %v696 = vld [vmem:[%s668 + $0xd8] sm:$0xff]
  %v697 = vld [vmem:[%s668 + $0xe0] sm:$0xff]
  %v698 = vld [vmem:[%s668 + $0xe8] sm:$0xff]
  %v699 = vld [vmem:[%s668 + $0xf0] sm:$0xff]
  %v700 = vld [vmem:[%s668 + $0xf8] sm:$0xff]
  %v733 = vunpack.c.l.b16 %v669
  %v734 = vunpack.c.h.b16 %v669
  %v735 = vunpack.c.l.b16 %v670
  %v736 = vunpack.c.h.b16 %v670
  %v737 = vunpack.c.l.b16 %v671
  %v738 = vunpack.c.h.b16 %v671
  %v739 = vunpack.c.l.b16 %v672
  %v740 = vunpack.c.h.b16 %v672
  %v741 = vunpack.c.l.b16 %v673
  %v742 = vunpack.c.h.b16 %v673
  %v743 = vunpack.c.l.b16 %v674
  %v744 = vunpack.c.h.b16 %v674
  %v745 = vunpack.c.l.b16 %v675
  %v746 = vunpack.c.h.b16 %v675
  %v747 = vunpack.c.l.b16 %v676
  %v748 = vunpack.c.h.b16 %v676
  %v749 = vunpack.c.l.b16 %v677
  %v750 = vunpack.c.h.b16 %v677
  %v751 = vunpack.c.l.b16 %v678
  %v752 = vunpack.c.h.b16 %v678
  %v753 = vunpack.c.l.b16 %v679
  %v754 = vunpack.c.h.b16 %v679
  %v755 = vunpack.c.l.b16 %v680
  %v756 = vunpack.c.h.b16 %v680
  %v757 = vunpack.c.l.b16 %v681
  %v758 = vunpack.c.h.b16 %v681
  %v759 = vunpack.c.l.b16 %v682
  %v760 = vunpack.c.h.b16 %v682
  %v761 = vunpack.c.l.b16 %v683
  %v762 = vunpack.c.h.b16 %v683
  %v763 = vunpack.c.l.b16 %v684
  %v764 = vunpack.c.h.b16 %v684
  %v765 = vunpack.c.l.b16 %v685
  %v766 = vunpack.c.h.b16 %v685
  %v767 = vunpack.c.l.b16 %v686
  %v768 = vunpack.c.h.b16 %v686
  %v769 = vunpack.c.l.b16 %v687
  %v770 = vunpack.c.h.b16 %v687
  %v771 = vunpack.c.l.b16 %v688
  %v772 = vunpack.c.h.b16 %v688
  %v773 = vunpack.c.l.b16 %v689
  %v774 = vunpack.c.h.b16 %v689
  %v775 = vunpack.c.l.b16 %v690
  %v776 = vunpack.c.h.b16 %v690
  %v777 = vunpack.c.l.b16 %v691
  %v778 = vunpack.c.h.b16 %v691
  %v779 = vunpack.c.l.b16 %v692
  %v780 = vunpack.c.h.b16 %v692
  %v781 = vunpack.c.l.b16 %v693
  %v782 = vunpack.c.h.b16 %v693
  %v783 = vunpack.c.l.b16 %v694
  %v784 = vunpack.c.h.b16 %v694
  %v785 = vunpack.c.l.b16 %v695
  %v786 = vunpack.c.h.b16 %v695
  %v787 = vunpack.c.l.b16 %v696
  %v788 = vunpack.c.h.b16 %v696
  %v789 = vunpack.c.l.b16 %v697
  %v790 = vunpack.c.h.b16 %v697
  %v791 = vunpack.c.l.b16 %v698
  %v792 = vunpack.c.h.b16 %v698
  %v793 = vunpack.c.l.b16 %v699
  %v794 = vunpack.c.h.b16 %v699
  %v795 = vunpack.c.l.b16 %v700
  %v796 = vunpack.c.h.b16 %v700
  %v797 = vpack.c.b16 %v737, %v733
  %v798 = vpack.c.b16 %v738, %v734
  %v799 = vpack.c.b16 %v739, %v735
  %v800 = vpack.c.b16 %v740, %v736
  %v801 = vpack.c.b16 %v745, %v741
  %v802 = vpack.c.b16 %v746, %v742
  %v803 = vpack.c.b16 %v747, %v743
  %v804 = vpack.c.b16 %v748, %v744
  %v805 = vpack.c.b16 %v753, %v749
  %v806 = vpack.c.b16 %v754, %v750
  %v807 = vpack.c.b16 %v755, %v751
  %v808 = vpack.c.b16 %v756, %v752
  %v809 = vpack.c.b16 %v761, %v757
  %v810 = vpack.c.b16 %v762, %v758
  %v811 = vpack.c.b16 %v763, %v759
  %v812 = vpack.c.b16 %v764, %v760
  %v813 = vpack.c.b16 %v769, %v765
  %v814 = vpack.c.b16 %v770, %v766
  %v815 = vpack.c.b16 %v771, %v767
  %v816 = vpack.c.b16 %v772, %v768
  %v817 = vpack.c.b16 %v777, %v773
  %v818 = vpack.c.b16 %v778, %v774
  %v819 = vpack.c.b16 %v779, %v775
  %v820 = vpack.c.b16 %v780, %v776
  %v821 = vpack.c.b16 %v785, %v781
  %v822 = vpack.c.b16 %v786, %v782
  %v823 = vpack.c.b16 %v787, %v783
  %v824 = vpack.c.b16 %v788, %v784
  %v825 = vpack.c.b16 %v793, %v789
  %v826 = vpack.c.b16 %v794, %v790
  %v827 = vpack.c.b16 %v795, %v791
  %v828 = vpack.c.b16 %v796, %v792
  %861 = vmatprep.subr.bf16.mxu0 %v798
  %862 = vmatpush1.bf16.msra.mxu0 %v797
  %863 = vmatprep.subr.bf16.mxu0 %v802
  %864 = vmatpush1.bf16.msra.mxu0 %v801
  %865 = vmatprep.subr.bf16.mxu0 %v806
  %866 = vmatpush1.bf16.msra.mxu0 %v805
  %867 = vmatprep.subr.bf16.mxu0 %v810
  %868 = vmatpush1.bf16.msra.mxu0 %v809
  %869 = vmatprep.subr.bf16.mxu0 %v814
  %870 = vmatpush1.bf16.msra.mxu0 %v813
  %871 = vmatprep.subr.bf16.mxu0 %v818
  %872 = vmatpush1.bf16.msra.mxu0 %v817
  %873 = vmatprep.subr.bf16.mxu0 %v822
  %874 = vmatpush1.bf16.msra.mxu0 %v821
  %875 = vmatprep.subr.bf16.mxu0 %v826
  %876 = vmatpush1.bf16.msra.mxu0 %v825
  %877 = vmatprep.subr.bf16.mxu0 0
  %878 = vmatpush1.bf16.msra.mxu0 0
  %879 = vmatprep.subr.bf16.mxu0 0
  %880 = vmatpush1.bf16.msra.mxu0 0
  %881 = vmatprep.subr.bf16.mxu0 0
  %882 = vmatpush1.bf16.msra.mxu0 0
  %883 = vmatprep.subr.bf16.mxu0 0
  %884 = vmatpush1.bf16.msra.mxu0 0
  %885 = vmatprep.subr.bf16.mxu0 0
  %886 = vmatpush1.bf16.msra.mxu0 0
  %887 = vmatprep.subr.bf16.mxu0 0
  %888 = vmatpush1.bf16.msra.mxu0 0
  %889 = vmatprep.subr.bf16.mxu0 0
  %890 = vmatpush1.bf16.msra.mxu0 0
  %891 = vmatprep.subr.bf16.mxu0 0
  %892 = vmatpush1.bf16.msra.mxu0 0
  %893 = vmatprep.mubr.bf16.mxu0 0
  %894 = vmatmul.mubr.bf16.gmra.mrb[0].mxu0 %v58
  %v895 = vpop.f32.mrb[0].mxu0
  %v896 = vadd.f32 0.0, %v895
  %v897 = vpop.f32.mrb[0].mxu0
  %v898 = vadd.f32 0.0, %v897
  %v899 = vpop.f32.mrb[0].mxu0
  %v900 = vpop.f32.mrb[0].mxu0
  %901 = vdwg.mxu0
  %902 = vmatprep.subr.bf16.mxu0 %v800
  %903 = vmatpush1.bf16.msra.mxu0 %v799
  %904 = vmatprep.subr.bf16.mxu0 %v804
  %905 = vmatpush1.bf16.msra.mxu0 %v803
  %906 = vmatprep.subr.bf16.mxu0 %v808
  %907 = vmatpush1.bf16.msra.mxu0 %v807
  %908 = vmatprep.subr.bf16.mxu0 %v812
  %909 = vmatpush1.bf16.msra.mxu0 %v811
  %910 = vmatprep.subr.bf16.mxu0 %v816
  %911 = vmatpush1.bf16.msra.mxu0 %v815
  %912 = vmatprep.subr.bf16.mxu0 %v820
  %913 = vmatpush1.bf16.msra.mxu0 %v819
  %914 = vmatprep.subr.bf16.mxu0 %v824
  %915 = vmatpush1.bf16.msra.mxu0 %v823
  %916 = vmatprep.subr.bf16.mxu0 %v828
  %917 = vmatpush1.bf16.msra.mxu0 %v827
  %918 = vmatprep.subr.bf16.mxu0 0
  %919 = vmatpush1.bf16.msra.mxu0 0
  %920 = vmatprep.subr.bf16.mxu0 0
  %921 = vmatpush1.bf16.msra.mxu0 0
  %922 = vmatprep.subr.bf16.mxu0 0
  %923 = vmatpush1.bf16.msra.mxu0 0
  %924 = vmatprep.subr.bf16.mxu0 0
  %925 = vmatpush1.bf16.msra.mxu0 0
  %926 = vmatprep.subr.bf16.mxu0 0
  %927 = vmatpush1.bf16.msra.mxu0 0
  %928 = vmatprep.subr.bf16.mxu0 0
  %929 = vmatpush1.bf16.msra.mxu0 0
  %930 = vmatprep.subr.bf16.mxu0 0
  %931 = vmatpush1.bf16.msra.mxu0 0
  %932 = vmatprep.subr.bf16.mxu0 0
  %933 = vmatpush1.bf16.msra.mxu0 0
  %934 = vmatprep.mubr.bf16.mxu0 0
  %935 = vmatmul.mubr.bf16.gmra.mrb[0].mxu0 %v58
  %v936 = vpop.f32.mrb[0].mxu0
  %v937 = vadd.f32 0.0, %v936
  %v938 = vpop.f32.mrb[0].mxu0
  %v939 = vadd.f32 0.0, %v938
  %v940 = vpop.f32.mrb[0].mxu0
  %v941 = vpop.f32.mrb[0].mxu0
  %942 = vdwg.mxu0
  %v943 = vmul.f32 %v896, 14.285714
  %v944 = vmul.f32 %v898, 14.285714
  %v945 = vmul.f32 %v937, 14.285714
  %v946 = vmul.f32 %v939, 14.285714
  %947 = vst [vmem:[%s3] sm:$0xff] %v943
  %948 = vst [vmem:[%s3 + $0x8] sm:$0xff] %v944
  %949 = vst [vmem:[%s3 + $0x10] sm:$0xff] %v945
  %950 = vst [vmem:[%s3 + $0x18] sm:$0xff] %v946
  %s951 = scalar_lea.vmem %s1, 768
  %v952 = vld [vmem:[%s951] sm:$0xff]
  %v953 = vld [vmem:[%s951 + $0x8] sm:$0xff]
  %v954 = vld [vmem:[%s951 + $0x10] sm:$0xff]
  %v955 = vld [vmem:[%s951 + $0x18] sm:$0xff]
  %v956 = vld [vmem:[%s951 + $0x20] sm:$0xff]
  %v957 = vld [vmem:[%s951 + $0x28] sm:$0xff]
  %v958 = vld [vmem:[%s951 + $0x30] sm:$0xff]
  %v959 = vld [vmem:[%s951 + $0x38] sm:$0xff]
  %v960 = vld [vmem:[%s951 + $0x40] sm:$0xff]
  %v961 = vld [vmem:[%s951 + $0x48] sm:$0xff]
  %v962 = vld [vmem:[%s951 + $0x50] sm:$0xff]
  %v963 = vld [vmem:[%s951 + $0x58] sm:$0xff]
  %v964 = vld [vmem:[%s951 + $0x60] sm:$0xff]
  %v965 = vld [vmem:[%s951 + $0x68] sm:$0xff]
  %v966 = vld [vmem:[%s951 + $0x70] sm:$0xff]
  %v967 = vld [vmem:[%s951 + $0x78] sm:$0xff]
  %v968 = vld [vmem:[%s951 + $0x80] sm:$0xff]
  %v969 = vld [vmem:[%s951 + $0x88] sm:$0xff]
  %v970 = vld [vmem:[%s951 + $0x90] sm:$0xff]
  %v971 = vld [vmem:[%s951 + $0x98] sm:$0xff]
  %v972 = vld [vmem:[%s951 + $0xa0] sm:$0xff]
  %v973 = vld [vmem:[%s951 + $0xa8] sm:$0xff]
  %v974 = vld [vmem:[%s951 + $0xb0] sm:$0xff]
  %v975 = vld [vmem:[%s951 + $0xb8] sm:$0xff]
  %v976 = vld [vmem:[%s951 + $0xc0] sm:$0xff]
  %v977 = vld [vmem:[%s951 + $0xc8] sm:$0xff]
  %v978 = vld [vmem:[%s951 + $0xd0] sm:$0xff]
  %v979 = vld [vmem:[%s951 + $0xd8] sm:$0xff]
  %v980 = vld [vmem:[%s951 + $0xe0] sm:$0xff]
  %v981 = vld [vmem:[%s951 + $0xe8] sm:$0xff]
  %v982 = vld [vmem:[%s951 + $0xf0] sm:$0xff]
  %v983 = vld [vmem:[%s951 + $0xf8] sm:$0xff]
  %v1016 = vunpack.c.l.b16 %v952
  %v1017 = vunpack.c.h.b16 %v952
  %v1018 = vunpack.c.l.b16 %v953
  %v1019 = vunpack.c.h.b16 %v953
  %v1020 = vunpack.c.l.b16 %v954
  %v1021 = vunpack.c.h.b16 %v954
  %v1022 = vunpack.c.l.b16 %v955
  %v1023 = vunpack.c.h.b16 %v955
  %v1024 = vunpack.c.l.b16 %v956
  %v1025 = vunpack.c.h.b16 %v956
  %v1026 = vunpack.c.l.b16 %v957
  %v1027 = vunpack.c.h.b16 %v957
  %v1028 = vunpack.c.l.b16 %v958
  %v1029 = vunpack.c.h.b16 %v958
  %v1030 = vunpack.c.l.b16 %v959
  %v1031 = vunpack.c.h.b16 %v959
  %v1032 = vunpack.c.l.b16 %v960
  %v1033 = vunpack.c.h.b16 %v960
  %v1034 = vunpack.c.l.b16 %v961
  %v1035 = vunpack.c.h.b16 %v961
  %v1036 = vunpack.c.l.b16 %v962
  %v1037 = vunpack.c.h.b16 %v962
  %v1038 = vunpack.c.l.b16 %v963
  %v1039 = vunpack.c.h.b16 %v963
  %v1040 = vunpack.c.l.b16 %v964
  %v1041 = vunpack.c.h.b16 %v964
  %v1042 = vunpack.c.l.b16 %v965
  %v1043 = vunpack.c.h.b16 %v965
  %v1044 = vunpack.c.l.b16 %v966
  %v1045 = vunpack.c.h.b16 %v966
  %v1046 = vunpack.c.l.b16 %v967
  %v1047 = vunpack.c.h.b16 %v967
  %v1048 = vunpack.c.l.b16 %v968
  %v1049 = vunpack.c.h.b16 %v968
  %v1050 = vunpack.c.l.b16 %v969
  %v1051 = vunpack.c.h.b16 %v969
  %v1052 = vunpack.c.l.b16 %v970
  %v1053 = vunpack.c.h.b16 %v970
  %v1054 = vunpack.c.l.b16 %v971
  %v1055 = vunpack.c.h.b16 %v971
  %v1056 = vunpack.c.l.b16 %v972
  %v1057 = vunpack.c.h.b16 %v972
  %v1058 = vunpack.c.l.b16 %v973
  %v1059 = vunpack.c.h.b16 %v973
  %v1060 = vunpack.c.l.b16 %v974
  %v1061 = vunpack.c.h.b16 %v974
  %v1062 = vunpack.c.l.b16 %v975
  %v1063 = vunpack.c.h.b16 %v975
  %v1064 = vunpack.c.l.b16 %v976
  %v1065 = vunpack.c.h.b16 %v976
  %v1066 = vunpack.c.l.b16 %v977
  %v1067 = vunpack.c.h.b16 %v977
  %v1068 = vunpack.c.l.b16 %v978
  %v1069 = vunpack.c.h.b16 %v978
  %v1070 = vunpack.c.l.b16 %v979
  %v1071 = vunpack.c.h.b16 %v979
  %v1072 = vunpack.c.l.b16 %v980
  %v1073 = vunpack.c.h.b16 %v980
  %v1074 = vunpack.c.l.b16 %v981
  %v1075 = vunpack.c.h.b16 %v981
  %v1076 = vunpack.c.l.b16 %v982
  %v1077 = vunpack.c.h.b16 %v982
  %v1078 = vunpack.c.l.b16 %v983
  %v1079 = vunpack.c.h.b16 %v983
  %v1080 = vpack.c.b16 %v1020, %v1016
  %v1081 = vpack.c.b16 %v1021, %v1017
  %v1082 = vpack.c.b16 %v1022, %v1018
  %v1083 = vpack.c.b16 %v1023, %v1019
  %v1084 = vpack.c.b16 %v1028, %v1024
  %v1085 = vpack.c.b16 %v1029, %v1025
  %v1086 = vpack.c.b16 %v1030, %v1026
  %v1087 = vpack.c.b16 %v1031, %v1027
  %v1088 = vpack.c.b16 %v1036, %v1032
  %v1089 = vpack.c.b16 %v1037, %v1033
  %v1090 = vpack.c.b16 %v1038, %v1034
  %v1091 = vpack.c.b16 %v1039, %v1035
  %v1092 = vpack.c.b16 %v1044, %v1040
  %v1093 = vpack.c.b16 %v1045, %v1041
  %v1094 = vpack.c.b16 %v1046, %v1042
  %v1095 = vpack.c.b16 %v1047, %v1043
  %v1096 = vpack.c.b16 %v1052, %v1048
  %v1097 = vpack.c.b16 %v1053, %v1049
  %v1098 = vpack.c.b16 %v1054, %v1050
  %v1099 = vpack.c.b16 %v1055, %v1051
  %v1100 = vpack.c.b16 %v1060, %v1056
  %v1101 = vpack.c.b16 %v1061, %v1057
  %v1102 = vpack.c.b16 %v1062, %v1058
  %v1103 = vpack.c.b16 %v1063, %v1059
  %v1104 = vpack.c.b16 %v1068, %v1064
  %v1105 = vpack.c.b16 %v1069, %v1065
  %v1106 = vpack.c.b16 %v1070, %v1066
  %v1107 = vpack.c.b16 %v1071, %v1067
  %v1108 = vpack.c.b16 %v1076, %v1072
  %v1109 = vpack.c.b16 %v1077, %v1073
  %v1110 = vpack.c.b16 %v1078, %v1074
  %v1111 = vpack.c.b16 %v1079, %v1075
  %1144 = vmatprep.subr.bf16.mxu0 %v1081
  %1145 = vmatpush1.bf16.msra.mxu0 %v1080
  %1146 = vmatprep.subr.bf16.mxu0 %v1085
  %1147 = vmatpush1.bf16.msra.mxu0 %v1084
  %1148 = vmatprep.subr.bf16.mxu0 %v1089
  %1149 = vmatpush1.bf16.msra.mxu0 %v1088
  %1150 = vmatprep.subr.bf16.mxu0 %v1093
  %1151 = vmatpush1.bf16.msra.mxu0 %v1092
  %1152 = vmatprep.subr.bf16.mxu0 %v1097
  %1153 = vmatpush1.bf16.msra.mxu0 %v1096
  %1154 = vmatprep.subr.bf16.mxu0 %v1101
  %1155 = vmatpush1.bf16.msra.mxu0 %v1100
  %1156 = vmatprep.subr.bf16.mxu0 %v1105
  %1157 = vmatpush1.bf16.msra.mxu0 %v1104
  %1158 = vmatprep.subr.bf16.mxu0 %v1109
  %1159 = vmatpush1.bf16.msra.mxu0 %v1108
  %1160 = vmatprep.subr.bf16.mxu0 0
  %1161 = vmatpush1.bf16.msra.mxu0 0
  %1162 = vmatprep.subr.bf16.mxu0 0
  %1163 = vmatpush1.bf16.msra.mxu0 0
  %1164 = vmatprep.subr.bf16.mxu0 0
  %1165 = vmatpush1.bf16.msra.mxu0 0
  %1166 = vmatprep.subr.bf16.mxu0 0
  %1167 = vmatpush1.bf16.msra.mxu0 0
  %1168 = vmatprep.subr.bf16.mxu0 0
  %1169 = vmatpush1.bf16.msra.mxu0 0
  %1170 = vmatprep.subr.bf16.mxu0 0
  %1171 = vmatpush1.bf16.msra.mxu0 0
  %1172 = vmatprep.subr.bf16.mxu0 0
  %1173 = vmatpush1.bf16.msra.mxu0 0
  %1174 = vmatprep.subr.bf16.mxu0 0
  %1175 = vmatpush1.bf16.msra.mxu0 0
  %1176 = vmatprep.mubr.bf16.mxu0 0
  %1177 = vmatmul.mubr.bf16.gmra.mrb[0].mxu0 %v59
  %v1178 = vpop.f32.mrb[0].mxu0
  %v1179 = vadd.f32 0.0, %v1178
  %v1180 = vpop.f32.mrb[0].mxu0
  %v1181 = vadd.f32 0.0, %v1180
  %v1182 = vpop.f32.mrb[0].mxu0
  %v1183 = vpop.f32.mrb[0].mxu0
  %1184 = vdwg.mxu0
  %1185 = vmatprep.subr.bf16.mxu0 %v1083
  %1186 = vmatpush1.bf16.msra.mxu0 %v1082
  %1187 = vmatprep.subr.bf16.mxu0 %v1087
  %1188 = vmatpush1.bf16.msra.mxu0 %v1086
  %1189 = vmatprep.subr.bf16.mxu0 %v1091
  %1190 = vmatpush1.bf16.msra.mxu0 %v1090
  %1191 = vmatprep.subr.bf16.mxu0 %v1095
  %1192 = vmatpush1.bf16.msra.mxu0 %v1094
  %1193 = vmatprep.subr.bf16.mxu0 %v1099
  %1194 = vmatpush1.bf16.msra.mxu0 %v1098
  %1195 = vmatprep.subr.bf16.mxu0 %v1103
  %1196 = vmatpush1.bf16.msra.mxu0 %v1102
  %1197 = vmatprep.subr.bf16.mxu0 %v1107
  %1198 = vmatpush1.bf16.msra.mxu0 %v1106
  %1199 = vmatprep.subr.bf16.mxu0 %v1111
  %1200 = vmatpush1.bf16.msra.mxu0 %v1110
  %1201 = vmatprep.subr.bf16.mxu0 0
  %1202 = vmatpush1.bf16.msra.mxu0 0
  %1203 = vmatprep.subr.bf16.mxu0 0
  %1204 = vmatpush1.bf16.msra.mxu0 0
  %1205 = vmatprep.subr.bf16.mxu0 0
  %1206 = vmatpush1.bf16.msra.mxu0 0
  %1207 = vmatprep.subr.bf16.mxu0 0
  %1208 = vmatpush1.bf16.msra.mxu0 0
  %1209 = vmatprep.subr.bf16.mxu0 0
  %1210 = vmatpush1.bf16.msra.mxu0 0
  %1211 = vmatprep.subr.bf16.mxu0 0
  %1212 = vmatpush1.bf16.msra.mxu0 0
  %1213 = vmatprep.subr.bf16.mxu0 0
  %1214 = vmatpush1.bf16.msra.mxu0 0
  %1215 = vmatprep.subr.bf16.mxu0 0
  %1216 = vmatpush1.bf16.msra.mxu0 0
  %1217 = vmatprep.mubr.bf16.mxu0 0
  %1218 = vmatmul.mubr.bf16.gmra.mrb[0].mxu0 %v59
  %v1219 = vpop.f32.mrb[0].mxu0
  %v1220 = vadd.f32 0.0, %v1219
  %v1221 = vpop.f32.mrb[0].mxu0
  %v1222 = vadd.f32 0.0, %v1221
  %v1223 = vpop.f32.mrb[0].mxu0
  %v1224 = vpop.f32.mrb[0].mxu0
  %1225 = vdwg.mxu0
  %v1226 = vmul.f32 %v1179, 14.285714
  %v1227 = vmul.f32 %v1181, 14.285714
  %v1228 = vmul.f32 %v1220, 14.285714
  %v1229 = vmul.f32 %v1222, 14.285714
  %s1230 = scalar_lea.vmem %s3, 32
  %1231 = vst [vmem:[%s1230] sm:$0xff] %v1226
  %1232 = vst [vmem:[%s1230 + $0x8] sm:$0xff] %v1227
  %1233 = vst [vmem:[%s1230 + $0x10] sm:$0xff] %v1228
  %1234 = vst [vmem:[%s1230 + $0x18] sm:$0xff] %v1229
  // Predicated region
  $region10: #{stda_forward.3} parent=0 // pred_check
    _
  $region11: #{stda_forward.3} parent=0 // pred_check_branch
    %1236 = sbr.rel (0) target = $region13
  $region12: #{stda_forward.3} parent=0 // pred_region
    _
  $region13: #{stda_forward.3} parent=0 // pred_fallthru
    _
  // Predicated region
  $region14: #{stda_forward.3} parent=0 // pred_check
    _
  $region15: #{stda_forward.3} parent=0 // pred_check_branch
    %1238 = sbr.rel (0) target = $region17
  $region16: #{stda_forward.3} parent=0 // pred_region
    _
  $region17: #{stda_forward.3} parent=0 // pred_fallthru
    _
  // Predicated region
  $region18: #{stda_forward.3} parent=0 // pred_check
    _
  $region19: #{stda_forward.3} parent=0 // pred_check_branch
    %1240 = sbr.rel (0) target = $region21
  $region20: #{stda_forward.3} parent=0 // pred_region
    _
  $region21: #{stda_forward.3} parent=0 // pred_fallthru
    _
  // Predicated region
  $region22: #{stda_forward.3} parent=0 // pred_check
    _
  $region23: #{stda_forward.3} parent=0 // pred_check_branch
    %1242 = sbr.rel (0) target = $region25
  $region24: #{stda_forward.3} parent=0 // pred_region
    _
  $region25: #{stda_forward.3} parent=0 // pred_fallthru
    _

// kernel: stda_forward.2
$region0: #{stda_forward.2}
  #allocation0 [shape = 'u32[]', space=smem, size = 0x4, offset = 0x4, fixed_abs, tag = 'smem constant byte address 0x4 - core index']
  #allocation1 [shape = 'u32[144,128]{1,0:T(1,128)}', space=vmem, size = 0x12000, scoped, tag = 'internal scratch']
  %s0 = inlined_call_operand.vmem [shape: bf16[2,8,384], index: 0, kind: input, shape index: {}]
  %s1 = inlined_call_operand.vmem [shape: bf16[2,384,512], index: 1, kind: input, shape index: {}]
  %s2 = inlined_call_operand.vmem [shape: f32[2,8,512], index: 2, kind: output, shape index: {}]
  %s3 = sld [smem:[#allocation0]]
  $region18: #{stda_forward.2} parent=0
    _
  %s5 = ssub.s32 1, %s3
  %s6 = scalar_select 0, %s5, %s3
  // Predicated region
  $region2: #{stda_forward.2} parent=0 // pred_check
    _
  $region3: #{stda_forward.2} parent=0 // pred_check_branch
    %8 = sbr.rel (0) target = $region5
  $region4: #{stda_forward.2} parent=0 // pred_region
    _
  $region5: #{stda_forward.2} parent=0 // pred_fallthru
    _
  // Predicated region
  $region6: #{stda_forward.2} parent=0 // pred_check
    _
  $region7: #{stda_forward.2} parent=0 // pred_check_branch
    %10 = sbr.rel (0) target = $region9
  $region8: #{stda_forward.2} parent=0 // pred_region
    _
  $region9: #{stda_forward.2} parent=0 // pred_fallthru
    _
  %v12 = vld [vmem:[%s0] sm:$0xff]
  %v13 = vld [vmem:[%s0 + $0x8] sm:$0xf]
  %v14 = vld [vmem:[%s1] sm:$0xff]
  %v15 = vld [vmem:[%s1 + $0x8] sm:$0xff]
  %v16 = vld [vmem:[%s1 + $0x10] sm:$0xff]
  %v17 = vld [vmem:[%s1 + $0x18] sm:$0xff]
  %v18 = vld [vmem:[%s1 + $0x20] sm:$0xff]
  %v19 = vld [vmem:[%s1 + $0x28] sm:$0xff]
  %v20 = vld [vmem:[%s1 + $0x30] sm:$0xff]
  %v21 = vld [vmem:[%s1 + $0x38] sm:$0xff]
  %v22 = vld [vmem:[%s1 + $0x40] sm:$0xff]
  %v23 = vld [vmem:[%s1 + $0x48] sm:$0xff]
  %v24 = vld [vmem:[%s1 + $0x50] sm:$0xff]
  %v25 = vld [vmem:[%s1 + $0x58] sm:$0xff]
  %v26 = vld [vmem:[%s1 + $0x60] sm:$0xff]
  %v27 = vld [vmem:[%s1 + $0x68] sm:$0xff]
  %v28 = vld [vmem:[%s1 + $0x70] sm:$0xff]
  %v29 = vld [vmem:[%s1 + $0x78] sm:$0xff]
  %v30 = vld [vmem:[%s1 + $0x80] sm:$0xff]
  %v31 = vld [vmem:[%s1 + $0x88] sm:$0xff]
  %v32 = vld [vmem:[%s1 + $0x90] sm:$0xff]
  %v33 = vld [vmem:[%s1 + $0x98] sm:$0xff]
  %v34 = vld [vmem:[%s1 + $0xa0] sm:$0xff]
  %v35 = vld [vmem:[%s1 + $0xa8] sm:$0xff]
  %v36 = vld [vmem:[%s1 + $0xb0] sm:$0xff]
  %v37 = vld [vmem:[%s1 + $0xb8] sm:$0xff]
  %v38 = vld [vmem:[%s1 + $0xc0] sm:$0xff]
  %v39 = vld [vmem:[%s1 + $0xc8] sm:$0xff]
  %v40 = vld [vmem:[%s1 + $0xd0] sm:$0xff]
  %v41 = vld [vmem:[%s1 + $0xd8] sm:$0xff]
  %v42 = vld [vmem:[%s1 + $0xe0] sm:$0xff]
  %v43 = vld [vmem:[%s1 + $0xe8] sm:$0xff]
  %v44 = vld [vmem:[%s1 + $0xf0] sm:$0xff]
  %v45 = vld [vmem:[%s1 + $0xf8] sm:$0xff]
  %v46 = vld [vmem:[%s1 + $0x100] sm:$0xff]
  %v47 = vld [vmem:[%s1 + $0x108] sm:$0xff]
  %v48 = vld [vmem:[%s1 + $0x110] sm:$0xff]
  %v49 = vld [vmem:[%s1 + $0x118] sm:$0xff]
  %v50 = vld [vmem:[%s1 + $0x120] sm:$0xff]
  %v51 = vld [vmem:[%s1 + $0x128] sm:$0xff]
  %v52 = vld [vmem:[%s1 + $0x130] sm:$0xff]
  %v53 = vld [vmem:[%s1 + $0x138] sm:$0xff]
  %v54 = vld [vmem:[%s1 + $0x140] sm:$0xff]
  %v55 = vld [vmem:[%s1 + $0x148] sm:$0xff]
  %v56 = vld [vmem:[%s1 + $0x150] sm:$0xff]
  %v57 = vld [vmem:[%s1 + $0x158] sm:$0xff]
  %v58 = vld [vmem:[%s1 + $0x160] sm:$0xff]
  %v59 = vld [vmem:[%s1 + $0x168] sm:$0xff]
  %v60 = vld [vmem:[%s1 + $0x170] sm:$0xff]
  %v61 = vld [vmem:[%s1 + $0x178] sm:$0xff]
  %v62 = vld [vmem:[%s1 + $0x180] sm:$0xff]
  %v63 = vld [vmem:[%s1 + $0x188] sm:$0xff]
  %v64 = vld [vmem:[%s1 + $0x190] sm:$0xff]
  %v65 = vld [vmem:[%s1 + $0x198] sm:$0xff]
  %v66 = vld [vmem:[%s1 + $0x1a0] sm:$0xff]
  %v67 = vld [vmem:[%s1 + $0x1a8] sm:$0xff]
  %v68 = vld [vmem:[%s1 + $0x1b0] sm:$0xff]
  %v69 = vld [vmem:[%s1 + $0x1b8] sm:$0xff]
  %v70 = vld [vmem:[%s1 + $0x1c0] sm:$0xff]
  %v71 = vld [vmem:[%s1 + $0x1c8] sm:$0xff]
  %v72 = vld [vmem:[%s1 + $0x1d0] sm:$0xff]
  %v73 = vld [vmem:[%s1 + $0x1d8] sm:$0xff]
  %v74 = vld [vmem:[%s1 + $0x1e0] sm:$0xff]
  %v75 = vld [vmem:[%s1 + $0x1e8] sm:$0xff]
  %v76 = vld [vmem:[%s1 + $0x1f0] sm:$0xff]
  %v77 = vld [vmem:[%s1 + $0x1f8] sm:$0xff]
  %v78 = vld [vmem:[%s1 + $0x200] sm:$0xff]
  %v79 = vld [vmem:[%s1 + $0x208] sm:$0xff]
  %v80 = vld [vmem:[%s1 + $0x210] sm:$0xff]
  %v81 = vld [vmem:[%s1 + $0x218] sm:$0xff]
  %v82 = vld [vmem:[%s1 + $0x220] sm:$0xff]
  %v83 = vld [vmem:[%s1 + $0x228] sm:$0xff]
  %v84 = vld [vmem:[%s1 + $0x230] sm:$0xff]
  %v85 = vld [vmem:[%s1 + $0x238] sm:$0xff]
  %v86 = vld [vmem:[%s1 + $0x240] sm:$0xff]
  %v87 = vld [vmem:[%s1 + $0x248] sm:$0xff]
  %v88 = vld [vmem:[%s1 + $0x250] sm:$0xff]
  %v89 = vld [vmem:[%s1 + $0x258] sm:$0xff]
  %v90 = vld [vmem:[%s1 + $0x260] sm:$0xff]
  %v91 = vld [vmem:[%s1 + $0x268] sm:$0xff]
  %v92 = vld [vmem:[%s1 + $0x270] sm:$0xff]
  %v93 = vld [vmem:[%s1 + $0x278] sm:$0xff]
  %v94 = vld [vmem:[%s1 + $0x280] sm:$0xff]
  %v95 = vld [vmem:[%s1 + $0x288] sm:$0xff]
  %v96 = vld [vmem:[%s1 + $0x290] sm:$0xff]
  %v97 = vld [vmem:[%s1 + $0x298] sm:$0xff]
  %v98 = vld [vmem:[%s1 + $0x2a0] sm:$0xff]
  %v99 = vld [vmem:[%s1 + $0x2a8] sm:$0xff]
  %v100 = vld [vmem:[%s1 + $0x2b0] sm:$0xff]
  %v101 = vld [vmem:[%s1 + $0x2b8] sm:$0xff]
  %v102 = vld [vmem:[%s1 + $0x2c0] sm:$0xff]
  %v103 = vld [vmem:[%s1 + $0x2c8] sm:$0xff]
  %v104 = vld [vmem:[%s1 + $0x2d0] sm:$0xff]
  %v105 = vld [vmem:[%s1 + $0x2d8] sm:$0xff]
  %v106 = vld [vmem:[%s1 + $0x2e0] sm:$0xff]
  %v107 = vld [vmem:[%s1 + $0x2e8] sm:$0xff]
  %v108 = vld [vmem:[%s1 + $0x2f0] sm:$0xff]
  %v109 = vld [vmem:[%s1 + $0x2f8] sm:$0xff]
  %v112 = vunpack.c.l.b16 %v12
  %v113 = vunpack.c.h.b16 %v12
  %v114 = vunpack.c.l.b16 %v13
  %v115 = vpack.c.b16 %v112, %v112
  %v116 = vpack.c.b16 %v113, %v113
  %v117 = vpack.c.b16 %v114, %v114
  %v217 = vunpack.c.l.b16 %v14
  %v218 = vunpack.c.h.b16 %v14
  %v219 = vunpack.c.l.b16 %v15
  %v220 = vunpack.c.h.b16 %v15
  %v221 = vunpack.c.l.b16 %v16
  %v222 = vunpack.c.h.b16 %v16
  %v223 = vunpack.c.l.b16 %v17
  %v224 = vunpack.c.h.b16 %v17
  %v225 = vunpack.c.l.b16 %v18
  %v226 = vunpack.c.h.b16 %v18
  %v227 = vunpack.c.l.b16 %v19
  %v228 = vunpack.c.h.b16 %v19
  %v229 = vunpack.c.l.b16 %v20
  %v230 = vunpack.c.h.b16 %v20
  %v231 = vunpack.c.l.b16 %v21
  %v232 = vunpack.c.h.b16 %v21
  %v233 = vunpack.c.l.b16 %v22
  %v234 = vunpack.c.h.b16 %v22
  %v235 = vunpack.c.l.b16 %v23
  %v236 = vunpack.c.h.b16 %v23
  %v237 = vunpack.c.l.b16 %v24
  %v238 = vunpack.c.h.b16 %v24
  %v239 = vunpack.c.l.b16 %v25
  %v240 = vunpack.c.h.b16 %v25
  %v241 = vunpack.c.l.b16 %v26
  %v242 = vunpack.c.h.b16 %v26
  %v243 = vunpack.c.l.b16 %v27
  %v244 = vunpack.c.h.b16 %v27
  %v245 = vunpack.c.l.b16 %v28
  %v246 = vunpack.c.h.b16 %v28
  %v247 = vunpack.c.l.b16 %v29
  %v248 = vunpack.c.h.b16 %v29
  %v249 = vunpack.c.l.b16 %v30
  %v250 = vunpack.c.h.b16 %v30
  %v251 = vunpack.c.l.b16 %v31
  %v252 = vunpack.c.h.b16 %v31
  %v253 = vunpack.c.l.b16 %v32
  %v254 = vunpack.c.h.b16 %v32
  %v255 = vunpack.c.l.b16 %v33
  %v256 = vunpack.c.h.b16 %v33
  %v257 = vunpack.c.l.b16 %v34
  %v258 = vunpack.c.h.b16 %v34
  %v259 = vunpack.c.l.b16 %v35
  %v260 = vunpack.c.h.b16 %v35
  %v261 = vunpack.c.l.b16 %v36
  %v262 = vunpack.c.h.b16 %v36
  %v263 = vunpack.c.l.b16 %v37
  %v264 = vunpack.c.h.b16 %v37
  %v265 = vunpack.c.l.b16 %v38
  %v266 = vunpack.c.h.b16 %v38
  %v267 = vunpack.c.l.b16 %v39
  %v268 = vunpack.c.h.b16 %v39
  %v269 = vunpack.c.l.b16 %v40
  %v270 = vunpack.c.h.b16 %v40
  %v271 = vunpack.c.l.b16 %v41
  %v272 = vunpack.c.h.b16 %v41
  %v273 = vunpack.c.l.b16 %v42
  %v274 = vunpack.c.h.b16 %v42
  %v275 = vunpack.c.l.b16 %v43
  %v276 = vunpack.c.h.b16 %v43
  %v277 = vunpack.c.l.b16 %v44
  %v278 = vunpack.c.h.b16 %v44
  %v279 = vunpack.c.l.b16 %v45
  %v280 = vunpack.c.h.b16 %v45
  %v281 = vunpack.c.l.b16 %v46
  %v282 = vunpack.c.h.b16 %v46
  %v283 = vunpack.c.l.b16 %v47
  %v284 = vunpack.c.h.b16 %v47
  %v285 = vunpack.c.l.b16 %v48
  %v286 = vunpack.c.h.b16 %v48
  %v287 = vunpack.c.l.b16 %v49
  %v288 = vunpack.c.h.b16 %v49
  %v289 = vunpack.c.l.b16 %v50
  %v290 = vunpack.c.h.b16 %v50
  %v291 = vunpack.c.l.b16 %v51
  %v292 = vunpack.c.h.b16 %v51
  %v293 = vunpack.c.l.b16 %v52
  %v294 = vunpack.c.h.b16 %v52
  %v295 = vunpack.c.l.b16 %v53
  %v296 = vunpack.c.h.b16 %v53
  %v297 = vunpack.c.l.b16 %v54
  %v298 = vunpack.c.h.b16 %v54
  %v299 = vunpack.c.l.b16 %v55
  %v300 = vunpack.c.h.b16 %v55
  %v301 = vunpack.c.l.b16 %v56
  %v302 = vunpack.c.h.b16 %v56
  %v303 = vunpack.c.l.b16 %v57
  %v304 = vunpack.c.h.b16 %v57
  %v305 = vunpack.c.l.b16 %v58
  %v306 = vunpack.c.h.b16 %v58
  %v307 = vunpack.c.l.b16 %v59
  %v308 = vunpack.c.h.b16 %v59
  %v309 = vunpack.c.l.b16 %v60
  %v310 = vunpack.c.h.b16 %v60
  %v311 = vunpack.c.l.b16 %v61
  %v312 = vunpack.c.h.b16 %v61
  %v313 = vunpack.c.l.b16 %v62
  %v314 = vunpack.c.h.b16 %v62
  %v315 = vunpack.c.l.b16 %v63
  %v316 = vunpack.c.h.b16 %v63
  %v317 = vunpack.c.l.b16 %v64
  %v318 = vunpack.c.h.b16 %v64
  %v319 = vunpack.c.l.b16 %v65
  %v320 = vunpack.c.h.b16 %v65
  %v321 = vunpack.c.l.b16 %v66
  %v322 = vunpack.c.h.b16 %v66
  %v323 = vunpack.c.l.b16 %v67
  %v324 = vunpack.c.h.b16 %v67
  %v325 = vunpack.c.l.b16 %v68
  %v326 = vunpack.c.h.b16 %v68
  %v327 = vunpack.c.l.b16 %v69
  %v328 = vunpack.c.h.b16 %v69
  %v329 = vunpack.c.l.b16 %v70
  %v330 = vunpack.c.h.b16 %v70
  %v331 = vunpack.c.l.b16 %v71
  %v332 = vunpack.c.h.b16 %v71
  %v333 = vunpack.c.l.b16 %v72
  %v334 = vunpack.c.h.b16 %v72
  %v335 = vunpack.c.l.b16 %v73
  %v336 = vunpack.c.h.b16 %v73
  %v337 = vunpack.c.l.b16 %v74
  %v338 = vunpack.c.h.b16 %v74
  %v339 = vunpack.c.l.b16 %v75
  %v340 = vunpack.c.h.b16 %v75
  %v341 = vunpack.c.l.b16 %v76
  %v342 = vunpack.c.h.b16 %v76
  %v343 = vunpack.c.l.b16 %v77
  %v344 = vunpack.c.h.b16 %v77
  %v345 = vunpack.c.l.b16 %v78
  %v346 = vunpack.c.h.b16 %v78
  %v347 = vunpack.c.l.b16 %v79
  %v348 = vunpack.c.h.b16 %v79
  %v349 = vunpack.c.l.b16 %v80
  %v350 = vunpack.c.h.b16 %v80
  %v351 = vunpack.c.l.b16 %v81
  %v352 = vunpack.c.h.b16 %v81
  %v353 = vunpack.c.l.b16 %v82
  %v354 = vunpack.c.h.b16 %v82
  %v355 = vunpack.c.l.b16 %v83
  %v356 = vunpack.c.h.b16 %v83
  %v357 = vunpack.c.l.b16 %v84
  %v358 = vunpack.c.h.b16 %v84
  %v359 = vunpack.c.l.b16 %v85
  %v360 = vunpack.c.h.b16 %v85
  %v361 = vunpack.c.l.b16 %v86
  %v362 = vunpack.c.h.b16 %v86
  %v363 = vunpack.c.l.b16 %v87
  %v364 = vunpack.c.h.b16 %v87
  %v365 = vunpack.c.l.b16 %v88
  %v366 = vunpack.c.h.b16 %v88
  %v367 = vunpack.c.l.b16 %v89
  %v368 = vunpack.c.h.b16 %v89
  %v369 = vunpack.c.l.b16 %v90
  %v370 = vunpack.c.h.b16 %v90
  %v371 = vunpack.c.l.b16 %v91
  %v372 = vunpack.c.h.b16 %v91
  %v373 = vunpack.c.l.b16 %v92
  %v374 = vunpack.c.h.b16 %v92
  %v375 = vunpack.c.l.b16 %v93
  %v376 = vunpack.c.h.b16 %v93
  %v377 = vunpack.c.l.b16 %v94
  %v378 = vunpack.c.h.b16 %v94
  %v379 = vunpack.c.l.b16 %v95
  %v380 = vunpack.c.h.b16 %v95
  %v381 = vunpack.c.l.b16 %v96
  %v382 = vunpack.c.h.b16 %v96
  %v383 = vunpack.c.l.b16 %v97
  %v384 = vunpack.c.h.b16 %v97
  %v385 = vunpack.c.l.b16 %v98
  %v386 = vunpack.c.h.b16 %v98
  %v387 = vunpack.c.l.b16 %v99
  %v388 = vunpack.c.h.b16 %v99
  %v389 = vunpack.c.l.b16 %v100
  %v390 = vunpack.c.h.b16 %v100
  %v391 = vunpack.c.l.b16 %v101
  %v392 = vunpack.c.h.b16 %v101
  %v393 = vunpack.c.l.b16 %v102
  %v394 = vunpack.c.h.b16 %v102
  %v395 = vunpack.c.l.b16 %v103
  %v396 = vunpack.c.h.b16 %v103
  %v397 = vunpack.c.l.b16 %v104
  %v398 = vunpack.c.h.b16 %v104
  %v399 = vunpack.c.l.b16 %v105
  %v400 = vunpack.c.h.b16 %v105
  %v401 = vunpack.c.l.b16 %v106
  %v402 = vunpack.c.h.b16 %v106
  %v403 = vunpack.c.l.b16 %v107
  %v404 = vunpack.c.h.b16 %v107
  %v405 = vunpack.c.l.b16 %v108
  %v406 = vunpack.c.h.b16 %v108
  %v407 = vunpack.c.l.b16 %v109
  %v408 = vunpack.c.h.b16 %v109
  %v409 = vpack.c.b16 %v221, %v217
  %v410 = vpack.c.b16 %v222, %v218
  %v411 = vpack.c.b16 %v223, %v219
  %v412 = vpack.c.b16 %v224, %v220
  %v413 = vpack.c.b16 %v229, %v225
  %v414 = vpack.c.b16 %v230, %v226
  %v415 = vpack.c.b16 %v231, %v227
  %v416 = vpack.c.b16 %v232, %v228
  %v417 = vpack.c.b16 %v237, %v233
  %v418 = vpack.c.b16 %v238, %v234
  %v419 = vpack.c.b16 %v239, %v235
  %v420 = vpack.c.b16 %v240, %v236
  %v421 = vpack.c.b16 %v245, %v241
  %v422 = vpack.c.b16 %v246, %v242
  %v423 = vpack.c.b16 %v247, %v243
  %v424 = vpack.c.b16 %v248, %v244
  %v425 = vpack.c.b16 %v253, %v249
  %v426 = vpack.c.b16 %v254, %v250
  %v427 = vpack.c.b16 %v255, %v251
  %v428 = vpack.c.b16 %v256, %v252
  %v429 = vpack.c.b16 %v261, %v257
  %v430 = vpack.c.b16 %v262, %v258
  %v431 = vpack.c.b16 %v263, %v259
  %v432 = vpack.c.b16 %v264, %v260
  %v433 = vpack.c.b16 %v269, %v265
  %v434 = vpack.c.b16 %v270, %v266
  %v435 = vpack.c.b16 %v271, %v267
  %v436 = vpack.c.b16 %v272, %v268
  %v437 = vpack.c.b16 %v277, %v273
  %v438 = vpack.c.b16 %v278, %v274
  %v439 = vpack.c.b16 %v279, %v275
  %v440 = vpack.c.b16 %v280, %v276
  %v441 = vpack.c.b16 %v285, %v281
  %v442 = vpack.c.b16 %v286, %v282
  %v443 = vpack.c.b16 %v287, %v283
  %v444 = vpack.c.b16 %v288, %v284
  %v445 = vpack.c.b16 %v293, %v289
  %v446 = vpack.c.b16 %v294, %v290
  %v447 = vpack.c.b16 %v295, %v291
  %v448 = vpack.c.b16 %v296, %v292
  %v449 = vpack.c.b16 %v301, %v297
  %v450 = vpack.c.b16 %v302, %v298
  %v451 = vpack.c.b16 %v303, %v299
  %v452 = vpack.c.b16 %v304, %v300
  %v453 = vpack.c.b16 %v309, %v305
  %v454 = vpack.c.b16 %v310, %v306
  %v455 = vpack.c.b16 %v311, %v307
  %v456 = vpack.c.b16 %v312, %v308
  %v457 = vpack.c.b16 %v317, %v313
  %v458 = vpack.c.b16 %v318, %v314
  %v459 = vpack.c.b16 %v319, %v315
  %v460 = vpack.c.b16 %v320, %v316
  %v461 = vpack.c.b16 %v325, %v321
  %v462 = vpack.c.b16 %v326, %v322
  %v463 = vpack.c.b16 %v327, %v323
  %v464 = vpack.c.b16 %v328, %v324
  %v465 = vpack.c.b16 %v333, %v329
  %v466 = vpack.c.b16 %v334, %v330
  %v467 = vpack.c.b16 %v335, %v331
  %v468 = vpack.c.b16 %v336, %v332
  %v469 = vpack.c.b16 %v341, %v337
  %v470 = vpack.c.b16 %v342, %v338
  %v471 = vpack.c.b16 %v343, %v339
  %v472 = vpack.c.b16 %v344, %v340
  %v473 = vpack.c.b16 %v349, %v345
  %v474 = vpack.c.b16 %v350, %v346
  %v475 = vpack.c.b16 %v351, %v347
  %v476 = vpack.c.b16 %v352, %v348
  %v477 = vpack.c.b16 %v357, %v353
  %v478 = vpack.c.b16 %v358, %v354
  %v479 = vpack.c.b16 %v359, %v355
  %v480 = vpack.c.b16 %v360, %v356
  %v481 = vpack.c.b16 %v365, %v361
  %v482 = vpack.c.b16 %v366, %v362
  %v483 = vpack.c.b16 %v367, %v363
  %v484 = vpack.c.b16 %v368, %v364
  %v485 = vpack.c.b16 %v373, %v369
  %v486 = vpack.c.b16 %v374, %v370
  %v487 = vpack.c.b16 %v375, %v371
  %v488 = vpack.c.b16 %v376, %v372
  %v489 = vpack.c.b16 %v381, %v377
  %v490 = vpack.c.b16 %v382, %v378
  %v491 = vpack.c.b16 %v383, %v379
  %v492 = vpack.c.b16 %v384, %v380
  %v493 = vpack.c.b16 %v389, %v385
  %v494 = vpack.c.b16 %v390, %v386
  %v495 = vpack.c.b16 %v391, %v387
  %v496 = vpack.c.b16 %v392, %v388
  %v497 = vpack.c.b16 %v397, %v393
  %v498 = vpack.c.b16 %v398, %v394
  %v499 = vpack.c.b16 %v399, %v395
  %v500 = vpack.c.b16 %v400, %v396
  %v501 = vpack.c.b16 %v405, %v401
  %v502 = vpack.c.b16 %v406, %v402
  %v503 = vpack.c.b16 %v407, %v403
  %v504 = vpack.c.b16 %v408, %v404
  %601 = vmatprep.subr.bf16.mxu0 %v410
  %602 = vmatpush1.bf16.msra.mxu0 %v409
  %603 = vmatprep.subr.bf16.mxu0 %v414
  %604 = vmatpush1.bf16.msra.mxu0 %v413
  %605 = vmatprep.subr.bf16.mxu0 %v418
  %606 = vmatpush1.bf16.msra.mxu0 %v417
  %607 = vmatprep.subr.bf16.mxu0 %v422
  %608 = vmatpush1.bf16.msra.mxu0 %v421
  %609 = vmatprep.subr.bf16.mxu0 %v426
  %610 = vmatpush1.bf16.msra.mxu0 %v425
  %611 = vmatprep.subr.bf16.mxu0 %v430
  %612 = vmatpush1.bf16.msra.mxu0 %v429
  %613 = vmatprep.subr.bf16.mxu0 %v434
  %614 = vmatpush1.bf16.msra.mxu0 %v433
  %615 = vmatprep.subr.bf16.mxu0 %v438
  %616 = vmatpush1.bf16.msra.mxu0 %v437
  %617 = vmatprep.subr.bf16.mxu0 %v442
  %618 = vmatpush1.bf16.msra.mxu0 %v441
  %619 = vmatprep.subr.bf16.mxu0 %v446
  %620 = vmatpush1.bf16.msra.mxu0 %v445
  %621 = vmatprep.subr.bf16.mxu0 %v450
  %622 = vmatpush1.bf16.msra.mxu0 %v449
  %623 = vmatprep.subr.bf16.mxu0 %v454
  %624 = vmatpush1.bf16.msra.mxu0 %v453
  %625 = vmatprep.subr.bf16.mxu0 %v458
  %626 = vmatpush1.bf16.msra.mxu0 %v457
  %627 = vmatprep.subr.bf16.mxu0 %v462
  %628 = vmatpush1.bf16.msra.mxu0 %v461
  %629 = vmatprep.subr.bf16.mxu0 %v466
  %630 = vmatpush1.bf16.msra.mxu0 %v465
  %631 = vmatprep.subr.bf16.mxu0 %v470
  %632 = vmatpush1.bf16.msra.mxu0 %v469
  %633 = vmatprep.mubr.bf16.mxu0 %v116
  %634 = vmatmul.mubr.bf16.gmra.mrb[0].mxu0 %v115
  %v635 = vpop.f32.mrb[0].mxu0
  %v636 = vadd.f32 0.0, %v635
  %v637 = vpop.f32.mrb[0].mxu0
  %v638 = vadd.f32 0.0, %v637
  %v639 = vpop.f32.mrb[0].mxu0
  %v640 = vpop.f32.mrb[0].mxu0
  %641 = vdwg.mxu0
  %642 = vmatprep.subr.bf16.mxu0 %v474
  %643 = vmatpush1.bf16.msra.mxu0 %v473
  %644 = vmatprep.subr.bf16.mxu0 %v478
  %645 = vmatpush1.bf16.msra.mxu0 %v477
  %646 = vmatprep.subr.bf16.mxu0 %v482
  %647 = vmatpush1.bf16.msra.mxu0 %v481
  %648 = vmatprep.subr.bf16.mxu0 %v486
  %649 = vmatpush1.bf16.msra.mxu0 %v485
  %650 = vmatprep.subr.bf16.mxu0 %v490
  %651 = vmatpush1.bf16.msra.mxu0 %v489
  %652 = vmatprep.subr.bf16.mxu0 %v494
  %653 = vmatpush1.bf16.msra.mxu0 %v493
  %654 = vmatprep.subr.bf16.mxu0 %v498
  %655 = vmatpush1.bf16.msra.mxu0 %v497
  %656 = vmatprep.subr.bf16.mxu0 %v502
  %657 = vmatpush1.bf16.msra.mxu0 %v501
  %658 = vmatprep.subr.bf16.mxu0 0
  %659 = vmatpush1.bf16.msra.mxu0 0
  %660 = vmatprep.subr.bf16.mxu0 0
  %661 = vmatpush1.bf16.msra.mxu0 0
  %662 = vmatprep.subr.bf16.mxu0 0
  %663 = vmatpush1.bf16.msra.mxu0 0
  %664 = vmatprep.subr.bf16.mxu0 0
  %665 = vmatpush1.bf16.msra.mxu0 0
  %666 = vmatprep.subr.bf16.mxu0 0
  %667 = vmatpush1.bf16.msra.mxu0 0
  %668 = vmatprep.subr.bf16.mxu0 0
  %669 = vmatpush1.bf16.msra.mxu0 0
  %670 = vmatprep.subr.bf16.mxu0 0
  %671 = vmatpush1.bf16.msra.mxu0 0
  %672 = vmatprep.subr.bf16.mxu0 0
  %673 = vmatpush1.bf16.msra.mxu0 0
  %674 = vmatprep.mubr.bf16.mxu0 0
  %675 = vmatmul.mubr.bf16.gmra.mrb[0].mxu0 %v117
  %v676 = vpop.f32.mrb[0].mxu0
  %v677 = vadd.f32 %v636, %v676
  %v678 = vpop.f32.mrb[0].mxu0
  %v679 = vadd.f32 %v638, %v678
  %v680 = vpop.f32.mrb[0].mxu0
  %v681 = vpop.f32.mrb[0].mxu0
  %682 = vdwg.mxu0
  %683 = vmatprep.subr.bf16.mxu0 %v412
  %684 = vmatpush1.bf16.msra.mxu0 %v411
  %685 = vmatprep.subr.bf16.mxu0 %v416
  %686 = vmatpush1.bf16.msra.mxu0 %v415
  %687 = vmatprep.subr.bf16.mxu0 %v420
  %688 = vmatpush1.bf16.msra.mxu0 %v419
  %689 = vmatprep.subr.bf16.mxu0 %v424
  %690 = vmatpush1.bf16.msra.mxu0 %v423
  %691 = vmatprep.subr.bf16.mxu0 %v428
  %692 = vmatpush1.bf16.msra.mxu0 %v427
  %693 = vmatprep.subr.bf16.mxu0 %v432
  %694 = vmatpush1.bf16.msra.mxu0 %v431
  %695 = vmatprep.subr.bf16.mxu0 %v436
  %696 = vmatpush1.bf16.msra.mxu0 %v435
  %697 = vmatprep.subr.bf16.mxu0 %v440
  %698 = vmatpush1.bf16.msra.mxu0 %v439
  %699 = vmatprep.subr.bf16.mxu0 %v444
  %700 = vmatpush1.bf16.msra.mxu0 %v443
  %701 = vmatprep.subr.bf16.mxu0 %v448
  %702 = vmatpush1.bf16.msra.mxu0 %v447
  %703 = vmatprep.subr.bf16.mxu0 %v452
  %704 = vmatpush1.bf16.msra.mxu0 %v451
  %705 = vmatprep.subr.bf16.mxu0 %v456
  %706 = vmatpush1.bf16.msra.mxu0 %v455
  %707 = vmatprep.subr.bf16.mxu0 %v460
  %708 = vmatpush1.bf16.msra.mxu0 %v459
  %709 = vmatprep.subr.bf16.mxu0 %v464
  %710 = vmatpush1.bf16.msra.mxu0 %v463
  %711 = vmatprep.subr.bf16.mxu0 %v468
  %712 = vmatpush1.bf16.msra.mxu0 %v467
  %713 = vmatprep.subr.bf16.mxu0 %v472
  %714 = vmatpush1.bf16.msra.mxu0 %v471
  %715 = vmatprep.mubr.bf16.mxu0 %v116
  %716 = vmatmul.mubr.bf16.gmra.mrb[0].mxu0 %v115
  %v717 = vpop.f32.mrb[0].mxu0
  %v718 = vadd.f32 0.0, %v717
  %v719 = vpop.f32.mrb[0].mxu0
  %v720 = vadd.f32 0.0, %v719
  %v721 = vpop.f32.mrb[0].mxu0
  %v722 = vpop.f32.mrb[0].mxu0
  %723 = vdwg.mxu0
  %724 = vmatprep.subr.bf16.mxu0 %v476
  %725 = vmatpush1.bf16.msra.mxu0 %v475
  %726 = vmatprep.subr.bf16.mxu0 %v480
  %727 = vmatpush1.bf16.msra.mxu0 %v479
  %728 = vmatprep.subr.bf16.mxu0 %v484
  %729 = vmatpush1.bf16.msra.mxu0 %v483
  %730 = vmatprep.subr.bf16.mxu0 %v488
  %731 = vmatpush1.bf16.msra.mxu0 %v487
  %732 = vmatprep.subr.bf16.mxu0 %v492
  %733 = vmatpush1.bf16.msra.mxu0 %v491
  %734 = vmatprep.subr.bf16.mxu0 %v496
  %735 = vmatpush1.bf16.msra.mxu0 %v495
  %736 = vmatprep.subr.bf16.mxu0 %v500
  %737 = vmatpush1.bf16.msra.mxu0 %v499
  %738 = vmatprep.subr.bf16.mxu0 %v504
  %739 = vmatpush1.bf16.msra.mxu0 %v503
  %740 = vmatprep.subr.bf16.mxu0 0
  %741 = vmatpush1.bf16.msra.mxu0 0
  %742 = vmatprep.subr.bf16.mxu0 0
  %743 = vmatpush1.bf16.msra.mxu0 0
  %744 = vmatprep.subr.bf16.mxu0 0
  %745 = vmatpush1.bf16.msra.mxu0 0
  %746 = vmatprep.subr.bf16.mxu0 0
  %747 = vmatpush1.bf16.msra.mxu0 0
  %748 = vmatprep.subr.bf16.mxu0 0
  %749 = vmatpush1.bf16.msra.mxu0 0
  %750 = vmatprep.subr.bf16.mxu0 0
  %751 = vmatpush1.bf16.msra.mxu0 0
  %752 = vmatprep.subr.bf16.mxu0 0
  %753 = vmatpush1.bf16.msra.mxu0 0
  %754 = vmatprep.subr.bf16.mxu0 0
  %755 = vmatpush1.bf16.msra.mxu0 0
  %756 = vmatprep.mubr.bf16.mxu0 0
  %757 = vmatmul.mubr.bf16.gmra.mrb[0].mxu0 %v117
  %v758 = vpop.f32.mrb[0].mxu0
  %v759 = vadd.f32 %v718, %v758
  %v760 = vpop.f32.mrb[0].mxu0
  %v761 = vadd.f32 %v720, %v760
  %v762 = vpop.f32.mrb[0].mxu0
  %v763 = vpop.f32.mrb[0].mxu0
  %764 = vdwg.mxu0
  %v765 = vmul.f32 %v677, %v677
  %766 = vadd.xlane.f32.xlu0 %v765
  %v767 = vpop.xlane.xlu0 %766
  %v768 = vmax.f32 %v767, 1e-24
  %v769 = vrsqrt.pop %v768
  %v770 = vmul.f32 %v677, %v769
  %771 = vst [vmem:[%s2] sm:$0xff] %v770
  %v772 = vmul.f32 %v679, %v679
  %773 = vadd.xlane.f32.xlu0 %v772
  %v774 = vpop.xlane.xlu0 %773
  %v775 = vmax.f32 %v774, 1e-24
  %v776 = vrsqrt.pop %v775
  %v777 = vmul.f32 %v679, %v776
  %778 = vst [vmem:[%s2 + $0x8] sm:$0xff] %v777
  %v779 = vmul.f32 %v759, %v759
  %780 = vadd.xlane.f32.xlu0 %v779
  %v781 = vpop.xlane.xlu0 %780
  %v782 = vmax.f32 %v781, 1e-24
  %v783 = vrsqrt.pop %v782
  %v784 = vmul.f32 %v759, %v783
  %785 = vst [vmem:[%s2 + $0x10] sm:$0xff] %v784
  %v786 = vmul.f32 %v761, %v761
  %787 = vadd.xlane.f32.xlu0 %v786
  %v788 = vpop.xlane.xlu0 %787
  %v789 = vmax.f32 %v788, 1e-24
  %v790 = vrsqrt.pop %v789
  %v791 = vmul.f32 %v761, %v790
  %792 = vst [vmem:[%s2 + $0x18] sm:$0xff] %v791
  %s793 = scalar_lea.vmem %s0, 12
  %v794 = vld [vmem:[%s793] sm:$0xff]
  %v795 = vld [vmem:[%s793 + $0x8] sm:$0xf]
  %s796 = scalar_lea.vmem %s1, 768
  %v797 = vld [vmem:[%s796] sm:$0xff]
  %v798 = vld [vmem:[%s796 + $0x8] sm:$0xff]
  %v799 = vld [vmem:[%s796 + $0x10] sm:$0xff]
  %v800 = vld [vmem:[%s796 + $0x18] sm:$0xff]
  %v801 = vld [vmem:[%s796 + $0x20] sm:$0xff]
  %v802 = vld [vmem:[%s796 + $0x28] sm:$0xff]
  %v803 = vld [vmem:[%s796 + $0x30] sm:$0xff]
  %v804 = vld [vmem:[%s796 + $0x38] sm:$0xff]
  %v805 = vld [vmem:[%s796 + $0x40] sm:$0xff]
  %v806 = vld [vmem:[%s796 + $0x48] sm:$0xff]
  %v807 = vld [vmem:[%s796 + $0x50] sm:$0xff]
  %v808 = vld [vmem:[%s796 + $0x58] sm:$0xff]
  %v809 = vld [vmem:[%s796 + $0x60] sm:$0xff]
  %v810 = vld [vmem:[%s796 + $0x68] sm:$0xff]
  %v811 = vld [vmem:[%s796 + $0x70] sm:$0xff]
  %v812 = vld [vmem:[%s796 + $0x78] sm:$0xff]
  %v813 = vld [vmem:[%s796 + $0x80] sm:$0xff]
  %v814 = vld [vmem:[%s796 + $0x88] sm:$0xff]
  %v815 = vld [vmem:[%s796 + $0x90] sm:$0xff]
  %v816 = vld [vmem:[%s796 + $0x98] sm:$0xff]
  %v817 = vld [vmem:[%s796 + $0xa0] sm:$0xff]
  %v818 = vld [vmem:[%s796 + $0xa8] sm:$0xff]
  %v819 = vld [vmem:[%s796 + $0xb0] sm:$0xff]
  %v820 = vld [vmem:[%s796 + $0xb8] sm:$0xff]
  %v821 = vld [vmem:[%s796 + $0xc0] sm:$0xff]
  %v822 = vld [vmem:[%s796 + $0xc8] sm:$0xff]
  %v823 = vld [vmem:[%s796 + $0xd0] sm:$0xff]
  %v824 = vld [vmem:[%s796 + $0xd8] sm:$0xff]
  %v825 = vld [vmem:[%s796 + $0xe0] sm:$0xff]
  %v826 = vld [vmem:[%s796 + $0xe8] sm:$0xff]
  %v827 = vld [vmem:[%s796 + $0xf0] sm:$0xff]
  %v828 = vld [vmem:[%s796 + $0xf8] sm:$0xff]
  %v829 = vld [vmem:[%s796 + $0x100] sm:$0xff]
  %v830 = vld [vmem:[%s796 + $0x108] sm:$0xff]
  %v831 = vld [vmem:[%s796 + $0x110] sm:$0xff]
  %v832 = vld [vmem:[%s796 + $0x118] sm:$0xff]
  %v833 = vld [vmem:[%s796 + $0x120] sm:$0xff]
  %v834 = vld [vmem:[%s796 + $0x128] sm:$0xff]
  %v835 = vld [vmem:[%s796 + $0x130] sm:$0xff]
  %v836 = vld [vmem:[%s796 + $0x138] sm:$0xff]
  %v837 = vld [vmem:[%s796 + $0x140] sm:$0xff]
  %v838 = vld [vmem:[%s796 + $0x148] sm:$0xff]
  %v839 = vld [vmem:[%s796 + $0x150] sm:$0xff]
  %v840 = vld [vmem:[%s796 + $0x158] sm:$0xff]
  %v841 = vld [vmem:[%s796 + $0x160] sm:$0xff]
  %v842 = vld [vmem:[%s796 + $0x168] sm:$0xff]
  %v843 = vld [vmem:[%s796 + $0x170] sm:$0xff]
  %v844 = vld [vmem:[%s796 + $0x178] sm:$0xff]
  %v845 = vld [vmem:[%s796 + $0x180] sm:$0xff]
  %v846 = vld [vmem:[%s796 + $0x188] sm:$0xff]
  %v847 = vld [vmem:[%s796 + $0x190] sm:$0xff]
  %v848 = vld [vmem:[%s796 + $0x198] sm:$0xff]
  %v849 = vld [vmem:[%s796 + $0x1a0] sm:$0xff]
  %v850 = vld [vmem:[%s796 + $0x1a8] sm:$0xff]
  %v851 = vld [vmem:[%s796 + $0x1b0] sm:$0xff]
  %v852 = vld [vmem:[%s796 + $0x1b8] sm:$0xff]
  %v853 = vld [vmem:[%s796 + $0x1c0] sm:$0xff]
  %v854 = vld [vmem:[%s796 + $0x1c8] sm:$0xff]
  %v855 = vld [vmem:[%s796 + $0x1d0] sm:$0xff]
  %v856 = vld [vmem:[%s796 + $0x1d8] sm:$0xff]
  %v857 = vld [vmem:[%s796 + $0x1e0] sm:$0xff]
  %v858 = vld [vmem:[%s796 + $0x1e8] sm:$0xff]
  %v859 = vld [vmem:[%s796 + $0x1f0] sm:$0xff]
  %v860 = vld [vmem:[%s796 + $0x1f8] sm:$0xff]
  %v861 = vld [vmem:[%s796 + $0x200] sm:$0xff]
  %v862 = vld [vmem:[%s796 + $0x208] sm:$0xff]
  %v863 = vld [vmem:[%s796 + $0x210] sm:$0xff]
  %v864 = vld [vmem:[%s796 + $0x218] sm:$0xff]
  %v865 = vld [vmem:[%s796 + $0x220] sm:$0xff]
  %v866 = vld [vmem:[%s796 + $0x228] sm:$0xff]
  %v867 = vld [vmem:[%s796 + $0x230] sm:$0xff]
  %v868 = vld [vmem:[%s796 + $0x238] sm:$0xff]
  %v869 = vld [vmem:[%s796 + $0x240] sm:$0xff]
  %v870 = vld [vmem:[%s796 + $0x248] sm:$0xff]
  %v871 = vld [vmem:[%s796 + $0x250] sm:$0xff]
  %v872 = vld [vmem:[%s796 + $0x258] sm:$0xff]
  %v873 = vld [vmem:[%s796 + $0x260] sm:$0xff]
  %v874 = vld [vmem:[%s796 + $0x268] sm:$0xff]
  %v875 = vld [vmem:[%s796 + $0x270] sm:$0xff]
  %v876 = vld [vmem:[%s796 + $0x278] sm:$0xff]
  %v877 = vld [vmem:[%s796 + $0x280] sm:$0xff]
  %v878 = vld [vmem:[%s796 + $0x288] sm:$0xff]
  %v879 = vld [vmem:[%s796 + $0x290] sm:$0xff]
  %v880 = vld [vmem:[%s796 + $0x298] sm:$0xff]
  %v881 = vld [vmem:[%s796 + $0x2a0] sm:$0xff]
  %v882 = vld [vmem:[%s796 + $0x2a8] sm:$0xff]
  %v883 = vld [vmem:[%s796 + $0x2b0] sm:$0xff]
  %v884 = vld [vmem:[%s796 + $0x2b8] sm:$0xff]
  %v885 = vld [vmem:[%s796 + $0x2c0] sm:$0xff]
  %v886 = vld [vmem:[%s796 + $0x2c8] sm:$0xff]
  %v887 = vld [vmem:[%s796 + $0x2d0] sm:$0xff]
  %v888 = vld [vmem:[%s796 + $0x2d8] sm:$0xff]
  %v889 = vld [vmem:[%s796 + $0x2e0] sm:$0xff]
  %v890 = vld [vmem:[%s796 + $0x2e8] sm:$0xff]
  %v891 = vld [vmem:[%s796 + $0x2f0] sm:$0xff]
  %v892 = vld [vmem:[%s796 + $0x2f8] sm:$0xff]
  %v895 = vunpack.c.l.b16 %v794
  %v896 = vunpack.c.h.b16 %v794
  %v897 = vunpack.c.l.b16 %v795
  %v898 = vpack.c.b16 %v895, %v895
  %v899 = vpack.c.b16 %v896, %v896
  %v900 = vpack.c.b16 %v897, %v897
  %v1000 = vunpack.c.l.b16 %v797
  %v1001 = vunpack.c.h.b16 %v797
  %v1002 = vunpack.c.l.b16 %v798
  %v1003 = vunpack.c.h.b16 %v798
  %v1004 = vunpack.c.l.b16 %v799
  %v1005 = vunpack.c.h.b16 %v799
  %v1006 = vunpack.c.l.b16 %v800
  %v1007 = vunpack.c.h.b16 %v800
  %v1008 = vunpack.c.l.b16 %v801
  %v1009 = vunpack.c.h.b16 %v801
  %v1010 = vunpack.c.l.b16 %v802
  %v1011 = vunpack.c.h.b16 %v802
  %v1012 = vunpack.c.l.b16 %v803
  %v1013 = vunpack.c.h.b16 %v803
  %v1014 = vunpack.c.l.b16 %v804
  %v1015 = vunpack.c.h.b16 %v804
  %v1016 = vunpack.c.l.b16 %v805
  %v1017 = vunpack.c.h.b16 %v805
  %v1018 = vunpack.c.l.b16 %v806
  %v1019 = vunpack.c.h.b16 %v806
  %v1020 = vunpack.c.l.b16 %v807
  %v1021 = vunpack.c.h.b16 %v807
  %v1022 = vunpack.c.l.b16 %v808
  %v1023 = vunpack.c.h.b16 %v808
  %v1024 = vunpack.c.l.b16 %v809
  %v1025 = vunpack.c.h.b16 %v809
  %v1026 = vunpack.c.l.b16 %v810
  %v1027 = vunpack.c.h.b16 %v810
  %v1028 = vunpack.c.l.b16 %v811
  %v1029 = vunpack.c.h.b16 %v811
  %v1030 = vunpack.c.l.b16 %v812
  %v1031 = vunpack.c.h.b16 %v812
  %v1032 = vunpack.c.l.b16 %v813
  %v1033 = vunpack.c.h.b16 %v813
  %v1034 = vunpack.c.l.b16 %v814
  %v1035 = vunpack.c.h.b16 %v814
  %v1036 = vunpack.c.l.b16 %v815
  %v1037 = vunpack.c.h.b16 %v815
  %v1038 = vunpack.c.l.b16 %v816
  %v1039 = vunpack.c.h.b16 %v816
  %v1040 = vunpack.c.l.b16 %v817
  %v1041 = vunpack.c.h.b16 %v817
  %v1042 = vunpack.c.l.b16 %v818
  %v1043 = vunpack.c.h.b16 %v818
  %v1044 = vunpack.c.l.b16 %v819
  %v1045 = vunpack.c.h.b16 %v819
  %v1046 = vunpack.c.l.b16 %v820
  %v1047 = vunpack.c.h.b16 %v820
  %v1048 = vunpack.c.l.b16 %v821
  %v1049 = vunpack.c.h.b16 %v821
  %v1050 = vunpack.c.l.b16 %v822
  %v1051 = vunpack.c.h.b16 %v822
  %v1052 = vunpack.c.l.b16 %v823
  %v1053 = vunpack.c.h.b16 %v823
  %v1054 = vunpack.c.l.b16 %v824
  %v1055 = vunpack.c.h.b16 %v824
  %v1056 = vunpack.c.l.b16 %v825
  %v1057 = vunpack.c.h.b16 %v825
  %v1058 = vunpack.c.l.b16 %v826
  %v1059 = vunpack.c.h.b16 %v826
  %v1060 = vunpack.c.l.b16 %v827
  %v1061 = vunpack.c.h.b16 %v827
  %v1062 = vunpack.c.l.b16 %v828
  %v1063 = vunpack.c.h.b16 %v828
  %v1064 = vunpack.c.l.b16 %v829
  %v1065 = vunpack.c.h.b16 %v829
  %v1066 = vunpack.c.l.b16 %v830
  %v1067 = vunpack.c.h.b16 %v830
  %v1068 = vunpack.c.l.b16 %v831
  %v1069 = vunpack.c.h.b16 %v831
  %v1070 = vunpack.c.l.b16 %v832
  %v1071 = vunpack.c.h.b16 %v832
  %v1072 = vunpack.c.l.b16 %v833
  %v1073 = vunpack.c.h.b16 %v833
  %v1074 = vunpack.c.l.b16 %v834
  %v1075 = vunpack.c.h.b16 %v834
  %v1076 = vunpack.c.l.b16 %v835
  %v1077 = vunpack.c.h.b16 %v835
  %v1078 = vunpack.c.l.b16 %v836
  %v1079 = vunpack.c.h.b16 %v836
  %v1080 = vunpack.c.l.b16 %v837
  %v1081 = vunpack.c.h.b16 %v837
  %v1082 = vunpack.c.l.b16 %v838
  %v1083 = vunpack.c.h.b16 %v838
  %v1084 = vunpack.c.l.b16 %v839
  %v1085 = vunpack.c.h.b16 %v839
  %v1086 = vunpack.c.l.b16 %v840
  %v1087 = vunpack.c.h.b16 %v840
  %v1088 = vunpack.c.l.b16 %v841
  %v1089 = vunpack.c.h.b16 %v841
  %v1090 = vunpack.c.l.b16 %v842
  %v1091 = vunpack.c.h.b16 %v842
  %v1092 = vunpack.c.l.b16 %v843
  %v1093 = vunpack.c.h.b16 %v843
  %v1094 = vunpack.c.l.b16 %v844
  %v1095 = vunpack.c.h.b16 %v844
  %v1096 = vunpack.c.l.b16 %v845
  %v1097 = vunpack.c.h.b16 %v845
  %v1098 = vunpack.c.l.b16 %v846
  %v1099 = vunpack.c.h.b16 %v846
  %v1100 = vunpack.c.l.b16 %v847
  %v1101 = vunpack.c.h.b16 %v847
  %v1102 = vunpack.c.l.b16 %v848
  %v1103 = vunpack.c.h.b16 %v848
  %v1104 = vunpack.c.l.b16 %v849
  %v1105 = vunpack.c.h.b16 %v849
  %v1106 = vunpack.c.l.b16 %v850
  %v1107 = vunpack.c.h.b16 %v850
  %v1108 = vunpack.c.l.b16 %v851
  %v1109 = vunpack.c.h.b16 %v851
  %v1110 = vunpack.c.l.b16 %v852
  %v1111 = vunpack.c.h.b16 %v852
  %v1112 = vunpack.c.l.b16 %v853
  %v1113 = vunpack.c.h.b16 %v853
  %v1114 = vunpack.c.l.b16 %v854
  %v1115 = vunpack.c.h.b16 %v854
  %v1116 = vunpack.c.l.b16 %v855
  %v1117 = vunpack.c.h.b16 %v855
  %v1118 = vunpack.c.l.b16 %v856
  %v1119 = vunpack.c.h.b16 %v856
  %v1120 = vunpack.c.l.b16 %v857
  %v1121 = vunpack.c.h.b16 %v857
  %v1122 = vunpack.c.l.b16 %v858
  %v1123 = vunpack.c.h.b16 %v858
  %v1124 = vunpack.c.l.b16 %v859
  %v1125 = vunpack.c.h.b16 %v859
  %v1126 = vunpack.c.l.b16 %v860
  %v1127 = vunpack.c.h.b16 %v860
  %v1128 = vunpack.c.l.b16 %v861
  %v1129 = vunpack.c.h.b16 %v861
  %v1130 = vunpack.c.l.b16 %v862
  %v1131 = vunpack.c.h.b16 %v862
  %v1132 = vunpack.c.l.b16 %v863
  %v1133 = vunpack.c.h.b16 %v863
  %v1134 = vunpack.c.l.b16 %v864
  %v1135 = vunpack.c.h.b16 %v864
  %v1136 = vunpack.c.l.b16 %v865
  %v1137 = vunpack.c.h.b16 %v865
  %v1138 = vunpack.c.l.b16 %v866
  %v1139 = vunpack.c.h.b16 %v866
  %v1140 = vunpack.c.l.b16 %v867
  %v1141 = vunpack.c.h.b16 %v867
  %v1142 = vunpack.c.l.b16 %v868
  %v1143 = vunpack.c.h.b16 %v868
  %v1144 = vunpack.c.l.b16 %v869
  %v1145 = vunpack.c.h.b16 %v869
  %v1146 = vunpack.c.l.b16 %v870
  %v1147 = vunpack.c.h.b16 %v870
  %v1148 = vunpack.c.l.b16 %v871
  %v1149 = vunpack.c.h.b16 %v871
  %v1150 = vunpack.c.l.b16 %v872
  %v1151 = vunpack.c.h.b16 %v872
  %v1152 = vunpack.c.l.b16 %v873
  %v1153 = vunpack.c.h.b16 %v873
  %v1154 = vunpack.c.l.b16 %v874
  %v1155 = vunpack.c.h.b16 %v874
  %v1156 = vunpack.c.l.b16 %v875
  %v1157 = vunpack.c.h.b16 %v875
  %v1158 = vunpack.c.l.b16 %v876
  %v1159 = vunpack.c.h.b16 %v876
  %v1160 = vunpack.c.l.b16 %v877
  %v1161 = vunpack.c.h.b16 %v877
  %v1162 = vunpack.c.l.b16 %v878
  %v1163 = vunpack.c.h.b16 %v878
  %v1164 = vunpack.c.l.b16 %v879
  %v1165 = vunpack.c.h.b16 %v879
  %v1166 = vunpack.c.l.b16 %v880
  %v1167 = vunpack.c.h.b16 %v880
  %v1168 = vunpack.c.l.b16 %v881
  %v1169 = vunpack.c.h.b16 %v881
  %v1170 = vunpack.c.l.b16 %v882
  %v1171 = vunpack.c.h.b16 %v882
  %v1172 = vunpack.c.l.b16 %v883
  %v1173 = vunpack.c.h.b16 %v883
  %v1174 = vunpack.c.l.b16 %v884
  %v1175 = vunpack.c.h.b16 %v884
  %v1176 = vunpack.c.l.b16 %v885
  %v1177 = vunpack.c.h.b16 %v885
  %v1178 = vunpack.c.l.b16 %v886
  %v1179 = vunpack.c.h.b16 %v886
  %v1180 = vunpack.c.l.b16 %v887
  %v1181 = vunpack.c.h.b16 %v887
  %v1182 = vunpack.c.l.b16 %v888
  %v1183 = vunpack.c.h.b16 %v888
  %v1184 = vunpack.c.l.b16 %v889
  %v1185 = vunpack.c.h.b16 %v889
  %v1186 = vunpack.c.l.b16 %v890
  %v1187 = vunpack.c.h.b16 %v890
  %v1188 = vunpack.c.l.b16 %v891
  %v1189 = vunpack.c.h.b16 %v891
  %v1190 = vunpack.c.l.b16 %v892
  %v1191 = vunpack.c.h.b16 %v892
  %v1192 = vpack.c.b16 %v1004, %v1000
  %v1193 = vpack.c.b16 %v1005, %v1001
  %v1194 = vpack.c.b16 %v1006, %v1002
  %v1195 = vpack.c.b16 %v1007, %v1003
  %v1196 = vpack.c.b16 %v1012, %v1008
  %v1197 = vpack.c.b16 %v1013, %v1009
  %v1198 = vpack.c.b16 %v1014, %v1010
  %v1199 = vpack.c.b16 %v1015, %v1011
  %v1200 = vpack.c.b16 %v1020, %v1016
  %v1201 = vpack.c.b16 %v1021, %v1017
  %v1202 = vpack.c.b16 %v1022, %v1018
  %v1203 = vpack.c.b16 %v1023, %v1019
  %v1204 = vpack.c.b16 %v1028, %v1024
  %v1205 = vpack.c.b16 %v1029, %v1025
  %v1206 = vpack.c.b16 %v1030, %v1026
  %v1207 = vpack.c.b16 %v1031, %v1027
  %v1208 = vpack.c.b16 %v1036, %v1032
  %v1209 = vpack.c.b16 %v1037, %v1033
  %v1210 = vpack.c.b16 %v1038, %v1034
  %v1211 = vpack.c.b16 %v1039, %v1035
  %v1212 = vpack.c.b16 %v1044, %v1040
  %v1213 = vpack.c.b16 %v1045, %v1041
  %v1214 = vpack.c.b16 %v1046, %v1042
  %v1215 = vpack.c.b16 %v1047, %v1043
  %v1216 = vpack.c.b16 %v1052, %v1048
  %v1217 = vpack.c.b16 %v1053, %v1049
  %v1218 = vpack.c.b16 %v1054, %v1050
  %v1219 = vpack.c.b16 %v1055, %v1051
  %v1220 = vpack.c.b16 %v1060, %v1056
  %v1221 = vpack.c.b16 %v1061, %v1057
  %v1222 = vpack.c.b16 %v1062, %v1058
  %v1223 = vpack.c.b16 %v1063, %v1059
  %v1224 = vpack.c.b16 %v1068, %v1064
  %v1225 = vpack.c.b16 %v1069, %v1065
  %v1226 = vpack.c.b16 %v1070, %v1066
  %v1227 = vpack.c.b16 %v1071, %v1067
  %v1228 = vpack.c.b16 %v1076, %v1072
  %v1229 = vpack.c.b16 %v1077, %v1073
  %v1230 = vpack.c.b16 %v1078, %v1074
  %v1231 = vpack.c.b16 %v1079, %v1075
  %v1232 = vpack.c.b16 %v1084, %v1080
  %v1233 = vpack.c.b16 %v1085, %v1081
  %v1234 = vpack.c.b16 %v1086, %v1082
  %v1235 = vpack.c.b16 %v1087, %v1083
  %v1236 = vpack.c.b16 %v1092, %v1088
  %v1237 = vpack.c.b16 %v1093, %v1089
  %v1238 = vpack.c.b16 %v1094, %v1090
  %v1239 = vpack.c.b16 %v1095, %v1091
  %v1240 = vpack.c.b16 %v1100, %v1096
  %v1241 = vpack.c.b16 %v1101, %v1097
  %v1242 = vpack.c.b16 %v1102, %v1098
  %v1243 = vpack.c.b16 %v1103, %v1099
  %v1244 = vpack.c.b16 %v1108, %v1104
  %v1245 = vpack.c.b16 %v1109, %v1105
  %v1246 = vpack.c.b16 %v1110, %v1106
  %v1247 = vpack.c.b16 %v1111, %v1107
  %v1248 = vpack.c.b16 %v1116, %v1112
  %v1249 = vpack.c.b16 %v1117, %v1113
  %v1250 = vpack.c.b16 %v1118, %v1114
  %v1251 = vpack.c.b16 %v1119, %v1115
  %v1252 = vpack.c.b16 %v1124, %v1120
  %v1253 = vpack.c.b16 %v1125, %v1121
  %v1254 = vpack.c.b16 %v1126, %v1122
  %v1255 = vpack.c.b16 %v1127, %v1123
  %v1256 = vpack.c.b16 %v1132, %v1128
  %v1257 = vpack.c.b16 %v1133, %v1129
  %v1258 = vpack.c.b16 %v1134, %v1130
  %v1259 = vpack.c.b16 %v1135, %v1131
  %v1260 = vpack.c.b16 %v1140, %v1136
  %v1261 = vpack.c.b16 %v1141, %v1137
  %v1262 = vpack.c.b16 %v1142, %v1138
  %v1263 = vpack.c.b16 %v1143, %v1139
  %v1264 = vpack.c.b16 %v1148, %v1144
  %v1265 = vpack.c.b16 %v1149, %v1145
  %v1266 = vpack.c.b16 %v1150, %v1146
  %v1267 = vpack.c.b16 %v1151, %v1147
  %v1268 = vpack.c.b16 %v1156, %v1152
  %v1269 = vpack.c.b16 %v1157, %v1153
  %v1270 = vpack.c.b16 %v1158, %v1154
  %v1271 = vpack.c.b16 %v1159, %v1155
  %v1272 = vpack.c.b16 %v1164, %v1160
  %v1273 = vpack.c.b16 %v1165, %v1161
  %v1274 = vpack.c.b16 %v1166, %v1162
  %v1275 = vpack.c.b16 %v1167, %v1163
  %v1276 = vpack.c.b16 %v1172, %v1168
  %v1277 = vpack.c.b16 %v1173, %v1169
  %v1278 = vpack.c.b16 %v1174, %v1170
  %v1279 = vpack.c.b16 %v1175, %v1171
  %v1280 = vpack.c.b16 %v1180, %v1176
  %v1281 = vpack.c.b16 %v1181, %v1177
  %v1282 = vpack.c.b16 %v1182, %v1178
  %v1283 = vpack.c.b16 %v1183, %v1179
  %v1284 = vpack.c.b16 %v1188, %v1184
  %v1285 = vpack.c.b16 %v1189, %v1185
  %v1286 = vpack.c.b16 %v1190, %v1186
  %v1287 = vpack.c.b16 %v1191, %v1187
  %1384 = vmatprep.subr.bf16.mxu0 %v1193
  %1385 = vmatpush1.bf16.msra.mxu0 %v1192
  %1386 = vmatprep.subr.bf16.mxu0 %v1197
  %1387 = vmatpush1.bf16.msra.mxu0 %v1196
  %1388 = vmatprep.subr.bf16.mxu0 %v1201
  %1389 = vmatpush1.bf16.msra.mxu0 %v1200
  %1390 = vmatprep.subr.bf16.mxu0 %v1205
  %1391 = vmatpush1.bf16.msra.mxu0 %v1204
  %1392 = vmatprep.subr.bf16.mxu0 %v1209
  %1393 = vmatpush1.bf16.msra.mxu0 %v1208
  %1394 = vmatprep.subr.bf16.mxu0 %v1213
  %1395 = vmatpush1.bf16.msra.mxu0 %v1212
  %1396 = vmatprep.subr.bf16.mxu0 %v1217
  %1397 = vmatpush1.bf16.msra.mxu0 %v1216
  %1398 = vmatprep.subr.bf16.mxu0 %v1221
  %1399 = vmatpush1.bf16.msra.mxu0 %v1220
  %1400 = vmatprep.subr.bf16.mxu0 %v1225
  %1401 = vmatpush1.bf16.msra.mxu0 %v1224
  %1402 = vmatprep.subr.bf16.mxu0 %v1229
  %1403 = vmatpush1.bf16.msra.mxu0 %v1228
  %1404 = vmatprep.subr.bf16.mxu0 %v1233
  %1405 = vmatpush1.bf16.msra.mxu0 %v1232
  %1406 = vmatprep.subr.bf16.mxu0 %v1237
  %1407 = vmatpush1.bf16.msra.mxu0 %v1236
  %1408 = vmatprep.subr.bf16.mxu0 %v1241
  %1409 = vmatpush1.bf16.msra.mxu0 %v1240
  %1410 = vmatprep.subr.bf16.mxu0 %v1245
  %1411 = vmatpush1.bf16.msra.mxu0 %v1244
  %1412 = vmatprep.subr.bf16.mxu0 %v1249
  %1413 = vmatpush1.bf16.msra.mxu0 %v1248
  %1414 = vmatprep.subr.bf16.mxu0 %v1253
  %1415 = vmatpush1.bf16.msra.mxu0 %v1252
  %1416 = vmatprep.mubr.bf16.mxu0 %v899
  %1417 = vmatmul.mubr.bf16.gmra.mrb[0].mxu0 %v898
  %v1418 = vpop.f32.mrb[0].mxu0
  %v1419 = vadd.f32 0.0, %v1418
  %v1420 = vpop.f32.mrb[0].mxu0
  %v1421 = vadd.f32 0.0, %v1420
  %v1422 = vpop.f32.mrb[0].mxu0
  %v1423 = vpop.f32.mrb[0].mxu0
  %1424 = vdwg.mxu0
  %1425 = vmatprep.subr.bf16.mxu0 %v1257
  %1426 = vmatpush1.bf16.msra.mxu0 %v1256
  %1427 = vmatprep.subr.bf16.mxu0 %v1261
  %1428 = vmatpush1.bf16.msra.mxu0 %v1260
  %1429 = vmatprep.subr.bf16.mxu0 %v1265
  %1430 = vmatpush1.bf16.msra.mxu0 %v1264
  %1431 = vmatprep.subr.bf16.mxu0 %v1269
  %1432 = vmatpush1.bf16.msra.mxu0 %v1268
  %1433 = vmatprep.subr.bf16.mxu0 %v1273
  %1434 = vmatpush1.bf16.msra.mxu0 %v1272
  %1435 = vmatprep.subr.bf16.mxu0 %v1277
  %1436 = vmatpush1.bf16.msra.mxu0 %v1276
  %1437 = vmatprep.subr.bf16.mxu0 %v1281
  %1438 = vmatpush1.bf16.msra.mxu0 %v1280
  %1439 = vmatprep.subr.bf16.mxu0 %v1285
  %1440 = vmatpush1.bf16.msra.mxu0 %v1284
  %1441 = vmatprep.subr.bf16.mxu0 0
  %1442 = vmatpush1.bf16.msra.mxu0 0
  %1443 = vmatprep.subr.bf16.mxu0 0
  %1444 = vmatpush1.bf16.msra.mxu0 0
  %1445 = vmatprep.subr.bf16.mxu0 0
  %1446 = vmatpush1.bf16.msra.mxu0 0
  %1447 = vmatprep.subr.bf16.mxu0 0
  %1448 = vmatpush1.bf16.msra.mxu0 0
  %1449 = vmatprep.subr.bf16.mxu0 0
  %1450 = vmatpush1.bf16.msra.mxu0 0
  %1451 = vmatprep.subr.bf16.mxu0 0
  %1452 = vmatpush1.bf16.msra.mxu0 0
  %1453 = vmatprep.subr.bf16.mxu0 0
  %1454 = vmatpush1.bf16.msra.mxu0 0
  %1455 = vmatprep.subr.bf16.mxu0 0
  %1456 = vmatpush1.bf16.msra.mxu0 0
  %1457 = vmatprep.mubr.bf16.mxu0 0
  %1458 = vmatmul.mubr.bf16.gmra.mrb[0].mxu0 %v900
  %v1459 = vpop.f32.mrb[0].mxu0
  %v1460 = vadd.f32 %v1419, %v1459
  %v1461 = vpop.f32.mrb[0].mxu0
  %v1462 = vadd.f32 %v1421, %v1461
  %v1463 = vpop.f32.mrb[0].mxu0
  %v1464 = vpop.f32.mrb[0].mxu0
  %1465 = vdwg.mxu0
  %1466 = vmatprep.subr.bf16.mxu0 %v1195
  %1467 = vmatpush1.bf16.msra.mxu0 %v1194
  %1468 = vmatprep.subr.bf16.mxu0 %v1199
  %1469 = vmatpush1.bf16.msra.mxu0 %v1198
  %1470 = vmatprep.subr.bf16.mxu0 %v1203
  %1471 = vmatpush1.bf16.msra.mxu0 %v1202
  %1472 = vmatprep.subr.bf16.mxu0 %v1207
  %1473 = vmatpush1.bf16.msra.mxu0 %v1206
  %1474 = vmatprep.subr.bf16.mxu0 %v1211
  %1475 = vmatpush1.bf16.msra.mxu0 %v1210
  %1476 = vmatprep.subr.bf16.mxu0 %v1215
  %1477 = vmatpush1.bf16.msra.mxu0 %v1214
  %1478 = vmatprep.subr.bf16.mxu0 %v1219
  %1479 = vmatpush1.bf16.msra.mxu0 %v1218
  %1480 = vmatprep.subr.bf16.mxu0 %v1223
  %1481 = vmatpush1.bf16.msra.mxu0 %v1222
  %1482 = vmatprep.subr.bf16.mxu0 %v1227
  %1483 = vmatpush1.bf16.msra.mxu0 %v1226
  %1484 = vmatprep.subr.bf16.mxu0 %v1231
  %1485 = vmatpush1.bf16.msra.mxu0 %v1230
  %1486 = vmatprep.subr.bf16.mxu0 %v1235
  %1487 = vmatpush1.bf16.msra.mxu0 %v1234
  %1488 = vmatprep.subr.bf16.mxu0 %v1239
  %1489 = vmatpush1.bf16.msra.mxu0 %v1238
  %1490 = vmatprep.subr.bf16.mxu0 %v1243
  %1491 = vmatpush1.bf16.msra.mxu0 %v1242
  %1492 = vmatprep.subr.bf16.mxu0 %v1247
  %1493 = vmatpush1.bf16.msra.mxu0 %v1246
  %1494 = vmatprep.subr.bf16.mxu0 %v1251
  %1495 = vmatpush1.bf16.msra.mxu0 %v1250
  %1496 = vmatprep.subr.bf16.mxu0 %v1255
  %1497 = vmatpush1.bf16.msra.mxu0 %v1254
  %1498 = vmatprep.mubr.bf16.mxu0 %v899
  %1499 = vmatmul.mubr.bf16.gmra.mrb[0].mxu0 %v898
  %v1500 = vpop.f32.mrb[0].mxu0
  %v1501 = vadd.f32 0.0, %v1500
  %v1502 = vpop.f32.mrb[0].mxu0
  %v1503 = vadd.f32 0.0, %v1502
  %v1504 = vpop.f32.mrb[0].mxu0
  %v1505 = vpop.f32.mrb[0].mxu0
  %1506 = vdwg.mxu0
  %1507 = vmatprep.subr.bf16.mxu0 %v1259
  %1508 = vmatpush1.bf16.msra.mxu0 %v1258
  %1509 = vmatprep.subr.bf16.mxu0 %v1263
  %1510 = vmatpush1.bf16.msra.mxu0 %v1262
  %1511 = vmatprep.subr.bf16.mxu0 %v1267
  %1512 = vmatpush1.bf16.msra.mxu0 %v1266
  %1513 = vmatprep.subr.bf16.mxu0 %v1271
  %1514 = vmatpush1.bf16.msra.mxu0 %v1270
  %1515 = vmatprep.subr.bf16.mxu0 %v1275
  %1516 = vmatpush1.bf16.msra.mxu0 %v1274
  %1517 = vmatprep.subr.bf16.mxu0 %v1279
  %1518 = vmatpush1.bf16.msra.mxu0 %v1278
  %1519 = vmatprep.subr.bf16.mxu0 %v1283
  %1520 = vmatpush1.bf16.msra.mxu0 %v1282
  %1521 = vmatprep.subr.bf16.mxu0 %v1287
  %1522 = vmatpush1.bf16.msra.mxu0 %v1286
  %1523 = vmatprep.subr.bf16.mxu0 0
  %1524 = vmatpush1.bf16.msra.mxu0 0
  %1525 = vmatprep.subr.bf16.mxu0 0
  %1526 = vmatpush1.bf16.msra.mxu0 0
  %1527 = vmatprep.subr.bf16.mxu0 0
  %1528 = vmatpush1.bf16.msra.mxu0 0
  %1529 = vmatprep.subr.bf16.mxu0 0
  %1530 = vmatpush1.bf16.msra.mxu0 0
  %1531 = vmatprep.subr.bf16.mxu0 0
  %1532 = vmatpush1.bf16.msra.mxu0 0
  %1533 = vmatprep.subr.bf16.mxu0 0
  %1534 = vmatpush1.bf16.msra.mxu0 0
  %1535 = vmatprep.subr.bf16.mxu0 0
  %1536 = vmatpush1.bf16.msra.mxu0 0
  %1537 = vmatprep.subr.bf16.mxu0 0
  %1538 = vmatpush1.bf16.msra.mxu0 0
  %1539 = vmatprep.mubr.bf16.mxu0 0
  %1540 = vmatmul.mubr.bf16.gmra.mrb[0].mxu0 %v900
  %v1541 = vpop.f32.mrb[0].mxu0
  %v1542 = vadd.f32 %v1501, %v1541
  %v1543 = vpop.f32.mrb[0].mxu0
  %v1544 = vadd.f32 %v1503, %v1543
  %v1545 = vpop.f32.mrb[0].mxu0
  %v1546 = vpop.f32.mrb[0].mxu0
  %1547 = vdwg.mxu0
  %v1548 = vmul.f32 %v1460, %v1460
  %1549 = vadd.xlane.f32.xlu0 %v1548
  %v1550 = vpop.xlane.xlu0 %1549
  %v1551 = vmax.f32 %v1550, 1e-24
  %v1552 = vrsqrt.pop %v1551
  %v1553 = vmul.f32 %v1460, %v1552
  %s1554 = scalar_lea.vmem %s2, 32
  %1555 = vst [vmem:[%s1554] sm:$0xff] %v1553
  %v1556 = vmul.f32 %v1462, %v1462
  %1557 = vadd.xlane.f32.xlu0 %v1556
  %v1558 = vpop.xlane.xlu0 %1557
  %v1559 = vmax.f32 %v1558, 1e-24
  %v1560 = vrsqrt.pop %v1559
  %v1561 = vmul.f32 %v1462, %v1560
  %1562 = vst [vmem:[%s1554 + $0x8] sm:$0xff] %v1561
  %v1563 = vmul.f32 %v1542, %v1542
  %1564 = vadd.xlane.f32.xlu0 %v1563
  %v1565 = vpop.xlane.xlu0 %1564
  %v1566 = vmax.f32 %v1565, 1e-24
  %v1567 = vrsqrt.pop %v1566
  %v1568 = vmul.f32 %v1542, %v1567
  %1569 = vst [vmem:[%s1554 + $0x10] sm:$0xff] %v1568
  %v1570 = vmul.f32 %v1544, %v1544
  %1571 = vadd.xlane.f32.xlu0 %v1570
  %v1572 = vpop.xlane.xlu0 %1571
  %v1573 = vmax.f32 %v1572, 1e-24
  %v1574 = vrsqrt.pop %v1573
  %v1575 = vmul.f32 %v1544, %v1574
  %1576 = vst [vmem:[%s1554 + $0x18] sm:$0xff] %v1575
  // Predicated region
  $region10: #{stda_forward.2} parent=0 // pred_check
    _
  $region11: #{stda_forward.2} parent=0 // pred_check_branch
    %1578 = sbr.rel (0) target = $region13
  $region12: #{stda_forward.2} parent=0 // pred_region
    _
  $region13: #{stda_forward.2} parent=0 // pred_fallthru
    _
  // Predicated region
  $region14: #{stda_forward.2} parent=0 // pred_check
    _
  $region15: #{stda_forward.2} parent=0 // pred_check_branch
    %1580 = sbr.rel (0) target = $region17
  $region16: #{stda_forward.2} parent=0 // pred_region
    _
  $region17: #{stda_forward.2} parent=0 // pred_fallthru
    _

</llo_original>
